<compile_context>
chip_gen: v7x
topology: tpu7x:2x2x1
jax: 0.10.0
libtpu: 0.0.40
codegen_flags: <defaults>
</compile_context>

<pallas_src>
import jax
import jax.numpy as jnp
from jax.experimental import pallas as pl
from jax.experimental.pallas import tpu as pltpu


def _round_up(x, m):
    return ((x + m - 1) // m) * m


def _tpu_generation_params():
    """Generation-aware VMEM budget / lane rounding defaults."""
    kind = ""
    try:
        dev = jax.devices()[0]
        if dev.platform == "tpu":
            kind = dev.device_kind.lower()
    except Exception:
        pass
    if "v7" in kind:   # 64 MiB VMEM per TensorCore, 256x256 MXU
        return {"vmem_budget": 40 << 20, "vmem_cap": 56 << 20, "lane_big": 256}
    if "v6" in kind:   # 128 MiB VMEM, 256x256 MXU
        return {"vmem_budget": 80 << 20, "vmem_cap": 100 << 20, "lane_big": 256}
    # v5e / unknown: 128 MiB VMEM, 128x128 MXU
    return {"vmem_budget": 64 << 20, "vmem_cap": 96 << 20, "lane_big": 128}


def _mlp_kernel(x_ref, w1_ref, b1_ref, w2_ref, b2_ref, o_ref, acc_ref):
    # Grid: (batch tiles ["parallel"], hidden chunks ["arbitrary"]).
    # x_ref : (tile_m, K)   bf16  -- constant block index over the hidden axis
    # w1_ref: (K, tile_h)   bf16
    # b1_ref: (1, tile_h)   f32
    # w2_ref: (tile_h, Np)  bf16
    # b2_ref: (1, Np)       f32
    # o_ref : (tile_m, Np)  out dtype, written on the last hidden chunk
    # acc_ref: (tile_m, Np) f32 VMEM accumulator
    h_idx = pl.program_id(1)

    @pl.when(h_idx == 0)
    def _init():
        acc_ref[...] = jnp.zeros_like(acc_ref)

    h = jnp.dot(x_ref[...], w1_ref[...], preferred_element_type=jnp.float32)
    h = h + b1_ref[...]          # bias in f32
    # dropout (eval mode) == identity
    h = jnp.maximum(h, 0.0)      # ReLU in f32 (no bf16 VPU on v5e)
    acc_ref[...] += jnp.dot(h.astype(w2_ref.dtype), w2_ref[...],
                            preferred_element_type=jnp.float32)

    @pl.when(h_idx == pl.num_programs(1) - 1)
    def _finalize():
        o_ref[...] = (acc_ref[...] + b2_ref[...]).astype(o_ref.dtype)


def _pad_cast_2d(a, rows, cols, dtype):
    a = jnp.asarray(a).astype(dtype)
    pr, pc = rows - a.shape[0], cols - a.shape[1]
    if pr or pc:
        a = jnp.pad(a, ((0, pr), (0, pc)))
    return a


def prepare_mlp_params(w1, b1, w2, b2, *, matmul_dtype=jnp.bfloat16):
    """Pad/cast the weights ONCE (hoisted out of the per-call path).

    Weights are in (in_features, out_features) layout, i.e. the kernel computes
    x @ W + b == PyTorch's x @ weight.T + bias.  Zero padding is exact: padded
    K columns / hidden rows contribute nothing, padded biases are 0 so
    ReLU(0)=0, padded output columns / batch rows are sliced off.
    """
    gen = _tpu_generation_params()
    dim_in, dim_hidden = w1.shape
    dim_out = w2.shape[1]
    lane_h = gen["lane_big"] if dim_hidden >= 256 else 128
    lane_n = gen["lane_big"] if dim_out >= 256 else 128
    K = _round_up(dim_in, 128)       # contraction dim, lane-aligned
    Hp = _round_up(dim_hidden, lane_h)
    Np = _round_up(dim_out, lane_n)  # lane-dense output -> unmasked stores
    xd = jnp.dtype(matmul_dtype)
    return {
        "w1": _pad_cast_2d(w1, K, Hp, xd),
        "b1": _pad_cast_2d(jnp.reshape(b1, (1, -1)), 1, Hp, jnp.float32),
        "w2": _pad_cast_2d(w2, Hp, Np, xd),
        "b2": _pad_cast_2d(jnp.reshape(b2, (1, -1)), 1, Np, jnp.float32),
        "dim_in": dim_in, "dim_hidden": dim_hidden, "dim_out": dim_out,
        "K": K, "Hp": Hp, "Np": Np, "matmul_dtype": xd,
    }


def _select_tiles(B, K, Hp, Np, x_bytes, out_bytes, vmem_budget, max_tile_m):
    """Pick (tile_m, tile_h) that fit the VMEM budget with low padding waste
    and >= 2 batch tiles whenever there are enough rows (megacore)."""
    B8 = _round_up(max(B, 1), 8)
    tm_cands = [t for t in (512, 256, 128, 64, 32, 16, 8)
                if t <= max(max_tile_m, 8)]
    if 8 not in tm_cands:
        tm_cands.append(8)
    th_cands = [Hp] + [t for t in (2048, 1024, 512, 256, 128)
                       if t < Hp and Hp % t == 0]

    def footprint(tm, th):
        wbuf = 1 if th == Hp else 2               # single-buffered when resident
        return (2 * tm * K * x_bytes              # x tile, double-buffered
                + wbuf * (K * th + th * Np) * 2   # bf16 w1/w2 chunks
                + wbuf * (th + Np) * 4            # f32 biases
                + 2 * tm * Np * out_bytes         # output tile, double-buffered
                + tm * Np * 4                     # f32 accumulator scratch
                + 6 * tm * th)                    # live hidden chunk (f32+bf16)

    for tm in tm_cands:
        Mp = _round_up(B8, tm)
        grid_m = Mp // tm
        if tm > 8:
            if (Mp - B8) / Mp > 0.10:             # avoid >10% dead padded rows
                continue
            if B8 >= 16 and grid_m < 2:           # keep both v7x cores busy
                continue
        for th in th_cands:
            need = footprint(tm, th)
            if need <= vmem_budget:
                return tm, th, Mp, grid_m, need
    tm, th = 8, th_cands[-1]
    Mp = _round_up(B8, tm)
    return tm, th, Mp, Mp // tm, footprint(tm, th)


def mlp_forward(x_nchw, params, *, out_dtype=jnp.float32, max_tile_m=512):
    """MLP forward (eval-mode dropout) using once-padded params."""
    gen = _tpu_generation_params()
    dim_in, dim_out = params["dim_in"], params["dim_out"]
    K, Hp, Np = params["K"], params["Hp"], params["Np"]
    xd = params["matmul_dtype"]

    B = x_nchw.shape[0]
    # torch .view(-1, C*H*W) == row-major reshape
    x_flat = jnp.reshape(x_nchw, (B, dim_in)).astype(xd)

    out_itemsize = jnp.dtype(out_dtype).itemsize
    tile_m, tile_h, Mp, grid_m, need = _select_tiles(
        B, K, Hp, Np, xd.itemsize, out_itemsize, gen["vmem_budget"], max_tile_m)
    grid_h = Hp // tile_h

    # Only pad x when it actually needs it (padding is an extra HBM round trip).
    if Mp != B or K != dim_in:
        x_p = jnp.pad(x_flat, ((0, Mp - B), (0, K - dim_in)))
    else:
        x_p = x_flat

    vmem_limit = int(min(max(2 * need, 32 << 20), gen["vmem_cap"]))

    weight_fetches = 1 if grid_h == 1 else grid_m
    cost = pl.CostEstimate(
        flops=2 * Mp * (K * Hp + Hp * Np),
        transcendentals=0,
        bytes_accessed=(x_p.size * xd.itemsize
                        + weight_fetches * (params["w1"].size
                                            + params["w2"].size) * xd.itemsize
                        + (params["b1"].size + params["b2"].size) * 4
                        + Mp * Np * out_itemsize),
    )

    def make_call(single_buffer_weights):
        w_kw = ({"pipeline_mode": pl.Buffered(1)}
                if single_buffer_weights else {})
        return pl.pallas_call(
            _mlp_kernel,
            out_shape=jax.ShapeDtypeStruct((Mp, Np), out_dtype),
            grid=(grid_m, grid_h),
            in_specs=[
                pl.BlockSpec((tile_m, K), lambda i, h: (i, 0)),        # x
                pl.BlockSpec((K, tile_h), lambda i, h: (0, h), **w_kw),  # w1
                pl.BlockSpec((1, tile_h), lambda i, h: (0, h), **w_kw),  # b1
                pl.BlockSpec((tile_h, Np), lambda i, h: (h, 0), **w_kw),  # w2
                pl.BlockSpec((1, Np), lambda i, h: (0, 0), **w_kw),      # b2
            ],
            out_specs=pl.BlockSpec((tile_m, Np), lambda i, h: (i, 0)),
            scratch_shapes=[pltpu.VMEM((tile_m, Np), jnp.float32)],
            compiler_params=pltpu.CompilerParams(
                dimension_semantics=("parallel", "arbitrary"),
                vmem_limit_bytes=vmem_limit),
            cost_estimate=cost,
        )

    args = (x_p, params["w1"], params["b1"], params["w2"], params["b2"])
    if grid_h == 1:
        # Weights/biases have constant index maps -> single-buffer them to
        # halve their VMEM footprint.  Fall back if Buffered(1) is rejected.
        try:
            out_p = make_call(True)(*args)
        except Exception:
            out_p = make_call(False)(*args)
    else:
        out_p = make_call(False)(*args)

    return out_p[:B, :dim_out]


if __name__ == "__main__":
    key = jax.random.PRNGKey(0)
    k_x, k_w1, k_b1, k_w2, k_b2 = jax.random.split(key, 5)

    # Small shapes: batch=2, channels=4, spatial=16 -> dim_in = 4*16*16 = 1024
    B, C, H, W = 2, 4, 16, 16
    dim_in = C * H * W
    dim_hidden = 32
    dim_out = 8

    x = jax.random.normal(k_x, (B, C, H, W), dtype=jnp.float32)

    # Deterministic PyTorch-Linear-style init (uniform in +/- 1/sqrt(fan_in)),
    # stored as (in_features, out_features) for the kernel.
    lim1 = 1.0 / (dim_in ** 0.5)
    w1 = jax.random.uniform(k_w1, (dim_in, dim_hidden), jnp.float32, -lim1, lim1)
    b1 = jax.random.uniform(k_b1, (dim_hidden,), jnp.float32, -lim1, lim1)

    lim2 = 1.0 / (dim_hidden ** 0.5)
    w2 = jax.random.uniform(k_w2, (dim_hidden, dim_out), jnp.float32, -lim2, lim2)
    b2 = jax.random.uniform(k_b2, (dim_out,), jnp.float32, -lim2, lim2)

    # Pad/cast the weights ONCE (hoisted out of the per-call path).
    params = prepare_mlp_params(w1, b1, w2, b2)

    out = mlp_forward(x, params)
    out = jax.block_until_ready(out)

    # Reference check in plain f32 JAX (eval-mode dropout == identity).
    # Tolerance relaxed because MXU inputs are bf16 (f32 accumulation).
    x_flat = jnp.reshape(x, (B, dim_in))
    ref = jnp.maximum(x_flat @ w1 + b1, 0.0) @ w2 + b2
    assert out.shape == (B, dim_out)
    assert jnp.allclose(out, ref, atol=2e-2, rtol=2e-2), (
        f"max abs err {jnp.max(jnp.abs(out - ref))}")

    print("KERNEL_OK")
</pallas_src>

<mosaic_0001>
module attributes {stable_mosaic.version = 11 : i64} {
  func.func @_mlp_kernel(%arg0: i32, %arg1: i32, %arg2: memref<8x1024xbf16, #tpu.memory_space<vmem>>, %arg3: memref<1024x128xbf16, #tpu.memory_space<vmem>>, %arg4: memref<1x128xf32, #tpu.memory_space<vmem>>, %arg5: memref<128x128xbf16, #tpu.memory_space<vmem>>, %arg6: memref<1x128xf32, #tpu.memory_space<vmem>>, %arg7: memref<8x128xf32, #tpu.memory_space<vmem>>, %arg8: memref<8x128xf32, #tpu.memory_space<vmem>>) attributes {dimension_semantics = [#tpu.dimension_semantics<parallel>, #tpu.dimension_semantics<arbitrary>], iteration_bounds = array<i64: 1, 1>, scalar_prefetch = 0 : i64, scratch_operands = 1 : i64, tpu.core_type = #tpu.core_type<tc>, window_params = [{transform_indices = @transform_0, window_bounds = array<i64: 8, 1024>}, {pipeline_mode = #tpu.pipeline_mode<synchronous>, transform_indices = @transform_1, window_bounds = array<i64: 1024, 128>}, {pipeline_mode = #tpu.pipeline_mode<synchronous>, transform_indices = @transform_2, window_bounds = array<i64: 1, 128>}, {pipeline_mode = #tpu.pipeline_mode<synchronous>, transform_indices = @transform_3, window_bounds = array<i64: 128, 128>}, {pipeline_mode = #tpu.pipeline_mode<synchronous>, transform_indices = @transform_4, window_bounds = array<i64: 1, 128>}, {transform_indices = @transform_5, window_bounds = array<i64: 8, 128>}]} {
    %c0_i32 = arith.constant 0 : i32
    %0 = arith.cmpi eq, %arg1, %c0_i32 : i32
    %1 = arith.extui %0 : i1 to i32
    %c0_i32_0 = arith.constant 0 : i32
    %2 = arith.cmpi ne, %1, %c0_i32_0 : i32
    scf.if %2 {
      %cst_16 = arith.constant 0.000000e+00 : f32
      %20 = vector.broadcast %cst_16 : f32 to vector<8x128xf32>
      %c0_17 = arith.constant 0 : index
      %c0_18 = arith.constant 0 : index
      %21 = vector.load %arg8[%c0_17, %c0_18] : memref<8x128xf32, #tpu.memory_space<vmem>>, vector<8x128xf32>
      tpu.vector_store %arg8[%c0_17, %c0_18], %20 {strides = array<i32>} : memref<8x128xf32, #tpu.memory_space<vmem>>, vector<8x128xf32>,
    } else {
    }
    %c0 = arith.constant 0 : index
    %c0_1 = arith.constant 0 : index
    %3 = vector.load %arg2[%c0, %c0_1] : memref<8x1024xbf16, #tpu.memory_space<vmem>>, vector<8x1024xbf16>
    %c0_2 = arith.constant 0 : index
    %c0_3 = arith.constant 0 : index
    %4 = vector.load %arg3[%c0_2, %c0_3] : memref<1024x128xbf16, #tpu.memory_space<vmem>>, vector<1024x128xbf16>
    %cst = arith.constant dense<0.000000e+00> : vector<8x128xf32>
    %5 = tpu.matmul %3, %4, %cst {dimension_numbers = #tpu.dot_dimension_numbers<[1], [0], [0], [1], [0, 0, 1, 1], [], []>} : vector<8x1024xbf16>, vector<1024x128xbf16>, vector<8x128xf32> -> vector<8x128xf32>
    %c0_4 = arith.constant 0 : index
    %c0_5 = arith.constant 0 : index
    %6 = vector.load %arg4[%c0_4, %c0_5] : memref<1x128xf32, #tpu.memory_space<vmem>>, vector<1x128xf32>
    %7 = vector.broadcast %6 : vector<1x128xf32> to vector<8x128xf32>
    %8 = arith.addf %5, %7 : vector<8x128xf32>
    %cst_6 = arith.constant 0.000000e+00 : f32
    %9 = vector.broadcast %cst_6 : f32 to vector<8x128xf32>
    %10 = arith.maximumf %8, %9 : vector<8x128xf32>
    %c0_7 = arith.constant 0 : index
    %c0_8 = arith.constant 0 : index
    %11 = vector.load %arg8[%c0_7, %c0_8] : memref<8x128xf32, #tpu.memory_space<vmem>>, vector<8x128xf32>
    %12 = arith.truncf %10 : vector<8x128xf32> to vector<8x128xbf16>
    %c0_9 = arith.constant 0 : index
    %c0_10 = arith.constant 0 : index
    %13 = vector.load %arg5[%c0_9, %c0_10] : memref<128x128xbf16, #tpu.memory_space<vmem>>, vector<128x128xbf16>
    %cst_11 = arith.constant dense<0.000000e+00> : vector<8x128xf32>
    %14 = tpu.matmul %12, %13, %cst_11 {dimension_numbers = #tpu.dot_dimension_numbers<[1], [0], [0], [1], [0, 0, 1, 1], [], []>} : vector<8x128xbf16>, vector<128x128xbf16>, vector<8x128xf32> -> vector<8x128xf32>
    %15 = arith.addf %11, %14 : vector<8x128xf32>
    %c0_12 = arith.constant 0 : index
    %c0_13 = arith.constant 0 : index
    %16 = vector.load %arg8[%c0_12, %c0_13] : memref<8x128xf32, #tpu.memory_space<vmem>>, vector<8x128xf32>
    tpu.vector_store %arg8[%c0_12, %c0_13], %15 {strides = array<i32>} : memref<8x128xf32, #tpu.memory_space<vmem>>, vector<8x128xf32>,
    %c0_i32_14 = arith.constant 0 : i32
    %17 = arith.cmpi eq, %arg1, %c0_i32_14 : i32
    %18 = arith.extui %17 : i1 to i32
    %c0_i32_15 = arith.constant 0 : i32
    %19 = arith.cmpi ne, %18, %c0_i32_15 : i32
    scf.if %19 {
      %c0_16 = arith.constant 0 : index
      %c0_17 = arith.constant 0 : index
      %20 = vector.load %arg8[%c0_16, %c0_17] : memref<8x128xf32, #tpu.memory_space<vmem>>, vector<8x128xf32>
      %c0_18 = arith.constant 0 : index
      %c0_19 = arith.constant 0 : index
      %21 = vector.load %arg6[%c0_18, %c0_19] : memref<1x128xf32, #tpu.memory_space<vmem>>, vector<1x128xf32>
      %22 = vector.broadcast %21 : vector<1x128xf32> to vector<8x128xf32>
      %23 = arith.addf %20, %22 : vector<8x128xf32>
      %c0_20 = arith.constant 0 : index
      %c0_21 = arith.constant 0 : index
      %24 = vector.load %arg7[%c0_20, %c0_21] : memref<8x128xf32, #tpu.memory_space<vmem>>, vector<8x128xf32>
      tpu.vector_store %arg7[%c0_20, %c0_21], %23 {strides = array<i32>} : memref<8x128xf32, #tpu.memory_space<vmem>>, vector<8x128xf32>,
    } else {
    }
    return
  }
  func.func @transform_0(%arg0: i32, %arg1: i32) -> (i32, i32) {
    %c0_i32 = arith.constant 0 : i32
    %c0_i32_0 = arith.constant 0 : i32
    return %arg0, %c0_i32 : i32, i32
  }
  func.func @transform_1(%arg0: i32, %arg1: i32) -> (i32, i32) {
    %c0_i32 = arith.constant 0 : i32
    %c0_i32_0 = arith.constant 0 : i32
    return %c0_i32, %arg1 : i32, i32
  }
  func.func @transform_2(%arg0: i32, %arg1: i32) -> (i32, i32) {
    %c0_i32 = arith.constant 0 : i32
    %c0_i32_0 = arith.constant 0 : i32
    return %c0_i32, %arg1 : i32, i32
  }
  func.func @transform_3(%arg0: i32, %arg1: i32) -> (i32, i32) {
    %c0_i32 = arith.constant 0 : i32
    %c0_i32_0 = arith.constant 0 : i32
    return %arg1, %c0_i32 : i32, i32
  }
  func.func @transform_4(%arg0: i32, %arg1: i32) -> (i32, i32) {
    %c0_i32 = arith.constant 0 : i32
    %c0_i32_0 = arith.constant 0 : i32
    %c0_i32_1 = arith.constant 0 : i32
    return %c0_i32, %c0_i32_0 : i32, i32
  }
  func.func @transform_5(%arg0: i32, %arg1: i32) -> (i32, i32) {
    %c0_i32 = arith.constant 0 : i32
    %c0_i32_0 = arith.constant 0 : i32
    return %arg0, %c0_i32 : i32, i32
  }
}

module attributes {stable_mosaic.version = 11 : i64} {
  func.func @_mlp_kernel(%arg0: i32, %arg1: i32, %arg2: memref<8x1024xbf16, #tpu.memory_space<vmem>>, %arg3: memref<1024x128xbf16, #tpu.memory_space<vmem>>, %arg4: memref<1x128xf32, #tpu.memory_space<vmem>>, %arg5: memref<128x128xbf16, #tpu.memory_space<vmem>>, %arg6: memref<1x128xf32, #tpu.memory_space<vmem>>, %arg7: memref<8x128xf32, #tpu.memory_space<vmem>>, %arg8: memref<8x128xf32, #tpu.memory_space<vmem>>) attributes {dimension_semantics = [#tpu.dimension_semantics<parallel>, #tpu.dimension_semantics<arbitrary>], iteration_bounds = array<i64: 1, 1>, scalar_prefetch = 0 : i64, scratch_operands = 1 : i64, tpu.core_type = #tpu.core_type<tc>, window_params = [{transform_indices = @transform_0, window_bounds = array<i64: 8, 1024>}, {transform_indices = @transform_1, window_bounds = array<i64: 1024, 128>}, {transform_indices = @transform_2, window_bounds = array<i64: 1, 128>}, {transform_indices = @transform_3, window_bounds = array<i64: 128, 128>}, {pipeline_mode = #tpu.pipeline_mode<synchronous>, transform_indices = @transform_4, window_bounds = array<i64: 1, 128>}, {transform_indices = @transform_5, window_bounds = array<i64: 8, 128>}]} {
    %c0_i32 = arith.constant 0 : i32
    %0 = arith.cmpi eq, %arg1, %c0_i32 : i32
    %1 = arith.extui %0 : i1 to i32
    %c0_i32_0 = arith.constant 0 : i32
    %2 = arith.cmpi ne, %1, %c0_i32_0 : i32
    scf.if %2 {
      %cst_16 = arith.constant 0.000000e+00 : f32
      %20 = vector.broadcast %cst_16 : f32 to vector<8x128xf32>
      %c0_17 = arith.constant 0 : index
      %c0_18 = arith.constant 0 : index
      %21 = vector.load %arg8[%c0_17, %c0_18] : memref<8x128xf32, #tpu.memory_space<vmem>>, vector<8x128xf32>
      tpu.vector_store %arg8[%c0_17, %c0_18], %20 {strides = array<i32>} : memref<8x128xf32, #tpu.memory_space<vmem>>, vector<8x128xf32>,
    } else {
    }
    %c0 = arith.constant 0 : index
    %c0_1 = arith.constant 0 : index
    %3 = vector.load %arg2[%c0, %c0_1] : memref<8x1024xbf16, #tpu.memory_space<vmem>>, vector<8x1024xbf16>
    %c0_2 = arith.constant 0 : index
    %c0_3 = arith.constant 0 : index
    %4 = vector.load %arg3[%c0_2, %c0_3] : memref<1024x128xbf16, #tpu.memory_space<vmem>>, vector<1024x128xbf16>
    %cst = arith.constant dense<0.000000e+00> : vector<8x128xf32>
    %5 = tpu.matmul %3, %4, %cst {dimension_numbers = #tpu.dot_dimension_numbers<[1], [0], [0], [1], [0, 0, 1, 1], [], []>} : vector<8x1024xbf16>, vector<1024x128xbf16>, vector<8x128xf32> -> vector<8x128xf32>
    %c0_4 = arith.constant 0 : index
    %c0_5 = arith.constant 0 : index
    %6 = vector.load %arg4[%c0_4, %c0_5] : memref<1x128xf32, #tpu.memory_space<vmem>>, vector<1x128xf32>
    %7 = vector.broadcast %6 : vector<1x128xf32> to vector<8x128xf32>
    %8 = arith.addf %5, %7 : vector<8x128xf32>
    %cst_6 = arith.constant 0.000000e+00 : f32
    %9 = vector.broadcast %cst_6 : f32 to vector<8x128xf32>
    %10 = arith.maximumf %8, %9 : vector<8x128xf32>
    %c0_7 = arith.constant 0 : index
    %c0_8 = arith.constant 0 : index
    %11 = vector.load %arg8[%c0_7, %c0_8] : memref<8x128xf32, #tpu.memory_space<vmem>>, vector<8x128xf32>
    %12 = arith.truncf %10 : vector<8x128xf32> to vector<8x128xbf16>
    %c0_9 = arith.constant 0 : index
    %c0_10 = arith.constant 0 : index
    %13 = vector.load %arg5[%c0_9, %c0_10] : memref<128x128xbf16, #tpu.memory_space<vmem>>, vector<128x128xbf16>
    %cst_11 = arith.constant dense<0.000000e+00> : vector<8x128xf32>
    %14 = tpu.matmul %12, %13, %cst_11 {dimension_numbers = #tpu.dot_dimension_numbers<[1], [0], [0], [1], [0, 0, 1, 1], [], []>} : vector<8x128xbf16>, vector<128x128xbf16>, vector<8x128xf32> -> vector<8x128xf32>
    %15 = arith.addf %11, %14 : vector<8x128xf32>
    %c0_12 = arith.constant 0 : index
    %c0_13 = arith.constant 0 : index
    %16 = vector.load %arg8[%c0_12, %c0_13] : memref<8x128xf32, #tpu.memory_space<vmem>>, vector<8x128xf32>
    tpu.vector_store %arg8[%c0_12, %c0_13], %15 {strides = array<i32>} : memref<8x128xf32, #tpu.memory_space<vmem>>, vector<8x128xf32>,
    %c0_i32_14 = arith.constant 0 : i32
    %17 = arith.cmpi eq, %arg1, %c0_i32_14 : i32
    %18 = arith.extui %17 : i1 to i32
    %c0_i32_15 = arith.constant 0 : i32
    %19 = arith.cmpi ne, %18, %c0_i32_15 : i32
    scf.if %19 {
      %c0_16 = arith.constant 0 : index
      %c0_17 = arith.constant 0 : index
      %20 = vector.load %arg8[%c0_16, %c0_17] : memref<8x128xf32, #tpu.memory_space<vmem>>, vector<8x128xf32>
      %c0_18 = arith.constant 0 : index
      %c0_19 = arith.constant 0 : index
      %21 = vector.load %arg6[%c0_18, %c0_19] : memref<1x128xf32, #tpu.memory_space<vmem>>, vector<1x128xf32>
      %22 = vector.broadcast %21 : vector<1x128xf32> to vector<8x128xf32>
      %23 = arith.addf %20, %22 : vector<8x128xf32>
      %c0_20 = arith.constant 0 : index
      %c0_21 = arith.constant 0 : index
      %24 = vector.load %arg7[%c0_20, %c0_21] : memref<8x128xf32, #tpu.memory_space<vmem>>, vector<8x128xf32>
      tpu.vector_store %arg7[%c0_20, %c0_21], %23 {strides = array<i32>} : memref<8x128xf32, #tpu.memory_space<vmem>>, vector<8x128xf32>,
    } else {
    }
    return
  }
  func.func @transform_0(%arg0: i32, %arg1: i32) -> (i32, i32) {
    %c0_i32 = arith.constant 0 : i32
    %c0_i32_0 = arith.constant 0 : i32
    return %arg0, %c0_i32 : i32, i32
  }
  func.func @transform_1(%arg0: i32, %arg1: i32) -> (i32, i32) {
    %c0_i32 = arith.constant 0 : i32
    %c0_i32_0 = arith.constant 0 : i32
    return %c0_i32, %arg1 : i32, i32
  }
  func.func @transform_2(%arg0: i32, %arg1: i32) -> (i32, i32) {
    %c0_i32 = arith.constant 0 : i32
    %c0_i32_0 = arith.constant 0 : i32
    return %c0_i32, %arg1 : i32, i32
  }
  func.func @transform_3(%arg0: i32, %arg1: i32) -> (i32, i32) {
    %c0_i32 = arith.constant 0 : i32
    %c0_i32_0 = arith.constant 0 : i32
    return %arg1, %c0_i32 : i32, i32
  }
  func.func @transform_4(%arg0: i32, %arg1: i32) -> (i32, i32) {
    %c0_i32 = arith.constant 0 : i32
    %c0_i32_0 = arith.constant 0 : i32
    %c0_i32_1 = arith.constant 0 : i32
    return %c0_i32, %c0_i32_0 : i32, i32
  }
  func.func @transform_5(%arg0: i32, %arg1: i32) -> (i32, i32) {
    %c0_i32 = arith.constant 0 : i32
    %c0_i32_0 = arith.constant 0 : i32
    return %arg0, %c0_i32 : i32, i32
  }
}

</mosaic_0001>

<llo_original>
// kernel: tpu_custom_call.1
$region0: #{tpu_custom_call.1}
  #allocation0 [shape = 'u32[]', space=smem, size = 0x4, offset = 0x4, fixed_abs, tag = 'smem constant byte address 0x4 - core index']
  #allocation1 [shape = 'u32[144,128]{1,0:T(1,128)}', space=vmem, size = 0x12000, scoped, tag = 'internal scratch']
  #allocation2 [shape = 'f32[8,128]{1,0:T(8,128)}', space=vmem, size = 0x1000, scoped, tag = 'scratch operand']
  %s0 = inlined_call_operand.hbm [shape: bf16[8,1024], index: 0, kind: input, shape index: {}]
  %s1 = inlined_call_operand.hbm [shape: bf16[1024,128], index: 1, kind: input, shape index: {}]
  %s2 = inlined_call_operand.vmem [shape: f32[1,128], index: 2, kind: input, shape index: {}]
  %s3 = inlined_call_operand.hbm [shape: bf16[128,128], index: 3, kind: input, shape index: {}]
  %s4 = inlined_call_operand.vmem [shape: f32[1,128], index: 4, kind: input, shape index: {}]
  %s5 = inlined_call_operand.hbm [shape: f32[8,128], index: 5, kind: output, shape index: {}]
  %s6 = sld [smem:[#allocation0]]
  $region50: #{tpu_custom_call.1} parent=0
    _
  %s8 = ssub.s32 1, %s6
  %s9 = scalar_select 0, %s8, %s6
  $region1: #{tpu_custom_call.1} parent=0
    #allocation3 [shape = 'u8[16384]{0}', space=vmem, size = 0x4000, scoped, tag = 'input window, operand 0, single buffered']
    #allocation4 [shape = 's32[1]{0}', space=sflag, size = 0x4, scoped, tag = 'scoped memory for tpu_custom_call.1']
    #allocation5 [shape = 's32[1]{0}', space=sflag, size = 0x4, scoped, tag = 'scoped memory for tpu_custom_call.1']
    #allocation6 [shape = 'u8[262144]{0}', space=vmem, size = 0x40000, scoped, tag = 'input window, operand 1, single buffered']
    #allocation7 [shape = 's32[1]{0}', space=sflag, size = 0x4, scoped, tag = 'scoped memory for tpu_custom_call.1']
    #allocation8 [shape = 'u8[32768]{0}', space=vmem, size = 0x8000, scoped, tag = 'input window, operand 3, single buffered']
    #allocation9 [shape = 'u8[4096]{0}', space=vmem, size = 0x1000, scoped, tag = 'output window, operand 0, single buffered']
    %10 = vsyncpa [#allocation4], 0
    %11 = vsyncpa [#allocation7], 0
    %12 = vsyncpa [#allocation5], 0
    // Predicated region
    $region2: #{tpu_custom_call.1} parent=1 // pred_check
      _
    $region3: #{tpu_custom_call.1} parent=1 // pred_check_branch
      %14 = sbr.rel (0) target = $region5
    $region4: #{tpu_custom_call.1} parent=1 // pred_region
      %s16 = ssub.s32 512, 512
      %17 = vsyncadd [#allocation4], %s16
      %s19 = sshll.u32 [#allocation3], 4
      %s20 = int_to_ptr.vmem [resolvable:$true] %s19
      %22 = dma.hbm_to_vmem [thread:$0]  %s0, 512, %s20, [#allocation4]
    $region5: #{tpu_custom_call.1} parent=1 // pred_fallthru
      _
    // Predicated region
    $region6: #{tpu_custom_call.1} parent=1 // pred_check
      _
    $region7: #{tpu_custom_call.1} parent=1 // pred_check_branch
      %24 = sbr.rel (0) target = $region9
    $region8: #{tpu_custom_call.1} parent=1 // pred_region
      %s26 = ssub.s32 8192, 8192
      %27 = vsyncadd [#allocation7], %s26
      %s28 = sshll.u32 [#allocation6], 4
      %s29 = int_to_ptr.vmem [resolvable:$true] %s28
      %34 = dma.hbm_to_vmem [thread:$0]  %s1, 8192, %s29, [#allocation7], 64, 64, 4
    $region9: #{tpu_custom_call.1} parent=1 // pred_fallthru
      _
    // Predicated region
    $region10: #{tpu_custom_call.1} parent=1 // pred_check
      _
    $region11: #{tpu_custom_call.1} parent=1 // pred_check_branch
      %36 = sbr.rel (0) target = $region13
    $region12: #{tpu_custom_call.1} parent=1 // pred_region
      _
    $region13: #{tpu_custom_call.1} parent=1 // pred_fallthru
      _
    // Predicated region
    $region14: #{tpu_custom_call.1} parent=1 // pred_check
      _
    $region15: #{tpu_custom_call.1} parent=1 // pred_check_branch
      %38 = sbr.rel (0) target = $region17
    $region16: #{tpu_custom_call.1} parent=1 // pred_region
      %s40 = ssub.s32 1024, 1024
      %41 = vsyncadd [#allocation7], %s40
      %s42 = sshll.u32 [#allocation8], 4
      %s43 = int_to_ptr.vmem [resolvable:$true] %s42
      %48 = dma.hbm_to_vmem [thread:$0]  %s3, 1024, %s43, [#allocation7], 64, 64, 4
    $region17: #{tpu_custom_call.1} parent=1 // pred_fallthru
      _
    // Predicated region
    $region18: #{tpu_custom_call.1} parent=1 // pred_check
      _
    $region19: #{tpu_custom_call.1} parent=1 // pred_check_branch
      %50 = sbr.rel (0) target = $region21
    $region20: #{tpu_custom_call.1} parent=1 // pred_region
      _
    $region21: #{tpu_custom_call.1} parent=1 // pred_fallthru
      _
    // Predicated region
    $region22: #{tpu_custom_call.1} parent=1 // pred_check
      _
    $region23: #{tpu_custom_call.1} parent=1 // pred_check_branch
      %52 = sbr.rel (0) target = $region25
    $region24: #{tpu_custom_call.1} parent=1 // pred_region
      %53 = dma.done [#allocation4], 512
    $region25: #{tpu_custom_call.1} parent=1 // pred_fallthru
      _
    // Predicated region
    $region26: #{tpu_custom_call.1} parent=1 // pred_check
      _
    $region27: #{tpu_custom_call.1} parent=1 // pred_check_branch
      %55 = sbr.rel (0) target = $region29
    $region28: #{tpu_custom_call.1} parent=1 // pred_region
      %56 = dma.done [#allocation7], 8192
    $region29: #{tpu_custom_call.1} parent=1 // pred_fallthru
      _
    // Predicated region
    $region30: #{tpu_custom_call.1} parent=1 // pred_check
      _
    $region31: #{tpu_custom_call.1} parent=1 // pred_check_branch
      %58 = sbr.rel (0) target = $region33
    $region32: #{tpu_custom_call.1} parent=1 // pred_region
      %59 = dma.done [#allocation7], 1024
    $region33: #{tpu_custom_call.1} parent=1 // pred_fallthru
      _
    %p61 = scmp.eq.s32.totalorder 0, 0
    // Predicated region
    $region34: #{tpu_custom_call.1} parent=1 // pred_check
      %p62 = pneg %p61
    $region35: #{tpu_custom_call.1} parent=1 // pred_check_branch
      %64 = sbr.rel (%p62) target = $region37
    $region36: #{tpu_custom_call.1} parent=1 // pred_region
      %65 = vst [vmem:[#allocation2] sm:$0xff] 0.0
    $region37: #{tpu_custom_call.1} parent=1 // pred_fallthru
      _
    %v66 = vld [vmem:[#allocation3] sm:$0xff]
    %v67 = vld [vmem:[#allocation3 + $0x8] sm:$0xff]
    %v68 = vld [vmem:[#allocation3 + $0x10] sm:$0xff]
    %v69 = vld [vmem:[#allocation3 + $0x18] sm:$0xff]
    %v70 = vld [vmem:[#allocation6] sm:$0xf]
    %v71 = vld [vmem:[#allocation6 + $0x4] sm:$0xf]
    %v72 = vld [vmem:[#allocation6 + $0x8] sm:$0xf]
    %v73 = vld [vmem:[#allocation6 + $0xc] sm:$0xf]
    %v74 = vld [vmem:[#allocation6 + $0x10] sm:$0xf]
    %v75 = vld [vmem:[#allocation6 + $0x14] sm:$0xf]
    %v76 = vld [vmem:[#allocation6 + $0x18] sm:$0xf]
    %v77 = vld [vmem:[#allocation6 + $0x1c] sm:$0xf]
    %v78 = vld [vmem:[#allocation6 + $0x20] sm:$0xf]
    %v79 = vld [vmem:[#allocation6 + $0x24] sm:$0xf]
    %v80 = vld [vmem:[#allocation6 + $0x28] sm:$0xf]
    %v81 = vld [vmem:[#allocation6 + $0x2c] sm:$0xf]
    %v82 = vld [vmem:[#allocation6 + $0x30] sm:$0xf]
    %v83 = vld [vmem:[#allocation6 + $0x34] sm:$0xf]
    %v84 = vld [vmem:[#allocation6 + $0x38] sm:$0xf]
    %v85 = vld [vmem:[#allocation6 + $0x3c] sm:$0xf]
    %v86 = vld [vmem:[#allocation6 + $0x40] sm:$0xf]
    %v87 = vld [vmem:[#allocation6 + $0x44] sm:$0xf]
    %v88 = vld [vmem:[#allocation6 + $0x48] sm:$0xf]
    %v89 = vld [vmem:[#allocation6 + $0x4c] sm:$0xf]
    %v90 = vld [vmem:[#allocation6 + $0x50] sm:$0xf]
    %v91 = vld [vmem:[#allocation6 + $0x54] sm:$0xf]
    %v92 = vld [vmem:[#allocation6 + $0x58] sm:$0xf]
    %v93 = vld [vmem:[#allocation6 + $0x5c] sm:$0xf]
    %v94 = vld [vmem:[#allocation6 + $0x60] sm:$0xf]
    %v95 = vld [vmem:[#allocation6 + $0x64] sm:$0xf]
    %v96 = vld [vmem:[#allocation6 + $0x68] sm:$0xf]
    %v97 = vld [vmem:[#allocation6 + $0x6c] sm:$0xf]
    %v98 = vld [vmem:[#allocation6 + $0x70] sm:$0xf]
    %v99 = vld [vmem:[#allocation6 + $0x74] sm:$0xf]
    %v100 = vld [vmem:[#allocation6 + $0x78] sm:$0xf]
    %v101 = vld [vmem:[#allocation6 + $0x7c] sm:$0xf]
    %v102 = vld [vmem:[#allocation6 + $0x80] sm:$0xf]
    %v103 = vld [vmem:[#allocation6 + $0x84] sm:$0xf]
    %v104 = vld [vmem:[#allocation6 + $0x88] sm:$0xf]
    %v105 = vld [vmem:[#allocation6 + $0x8c] sm:$0xf]
    %v106 = vld [vmem:[#allocation6 + $0x90] sm:$0xf]
    %v107 = vld [vmem:[#allocation6 + $0x94] sm:$0xf]
    %v108 = vld [vmem:[#allocation6 + $0x98] sm:$0xf]
    %v109 = vld [vmem:[#allocation6 + $0x9c] sm:$0xf]
    %v110 = vld [vmem:[#allocation6 + $0xa0] sm:$0xf]
    %v111 = vld [vmem:[#allocation6 + $0xa4] sm:$0xf]
    %v112 = vld [vmem:[#allocation6 + $0xa8] sm:$0xf]
    %v113 = vld [vmem:[#allocation6 + $0xac] sm:$0xf]
    %v114 = vld [vmem:[#allocation6 + $0xb0] sm:$0xf]
    %v115 = vld [vmem:[#allocation6 + $0xb4] sm:$0xf]
    %v116 = vld [vmem:[#allocation6 + $0xb8] sm:$0xf]
    %v117 = vld [vmem:[#allocation6 + $0xbc] sm:$0xf]
    %v118 = vld [vmem:[#allocation6 + $0xc0] sm:$0xf]
    %v119 = vld [vmem:[#allocation6 + $0xc4] sm:$0xf]
    %v120 = vld [vmem:[#allocation6 + $0xc8] sm:$0xf]
    %v121 = vld [vmem:[#allocation6 + $0xcc] sm:$0xf]
    %v122 = vld [vmem:[#allocation6 + $0xd0] sm:$0xf]
    %v123 = vld [vmem:[#allocation6 + $0xd4] sm:$0xf]
    %v124 = vld [vmem:[#allocation6 + $0xd8] sm:$0xf]
    %v125 = vld [vmem:[#allocation6 + $0xdc] sm:$0xf]
    %v126 = vld [vmem:[#allocation6 + $0xe0] sm:$0xf]
    %v127 = vld [vmem:[#allocation6 + $0xe4] sm:$0xf]
    %v128 = vld [vmem:[#allocation6 + $0xe8] sm:$0xf]
    %v129 = vld [vmem:[#allocation6 + $0xec] sm:$0xf]
    %v130 = vld [vmem:[#allocation6 + $0xf0] sm:$0xf]
    %v131 = vld [vmem:[#allocation6 + $0xf4] sm:$0xf]
    %v132 = vld [vmem:[#allocation6 + $0xf8] sm:$0xf]
    %v133 = vld [vmem:[#allocation6 + $0xfc] sm:$0xf]
    %v134 = vld [vmem:[#allocation6 + $0x100] sm:$0xf]
    %v135 = vld [vmem:[#allocation6 + $0x104] sm:$0xf]
    %v136 = vld [vmem:[#allocation6 + $0x108] sm:$0xf]
    %v137 = vld [vmem:[#allocation6 + $0x10c] sm:$0xf]
    %v138 = vld [vmem:[#allocation6 + $0x110] sm:$0xf]
    %v139 = vld [vmem:[#allocation6 + $0x114] sm:$0xf]
    %v140 = vld [vmem:[#allocation6 + $0x118] sm:$0xf]
    %v141 = vld [vmem:[#allocation6 + $0x11c] sm:$0xf]
    %v142 = vld [vmem:[#allocation6 + $0x120] sm:$0xf]
    %v143 = vld [vmem:[#allocation6 + $0x124] sm:$0xf]
    %v144 = vld [vmem:[#allocation6 + $0x128] sm:$0xf]
    %v145 = vld [vmem:[#allocation6 + $0x12c] sm:$0xf]
    %v146 = vld [vmem:[#allocation6 + $0x130] sm:$0xf]
    %v147 = vld [vmem:[#allocation6 + $0x134] sm:$0xf]
    %v148 = vld [vmem:[#allocation6 + $0x138] sm:$0xf]
    %v149 = vld [vmem:[#allocation6 + $0x13c] sm:$0xf]
    %v150 = vld [vmem:[#allocation6 + $0x140] sm:$0xf]
    %v151 = vld [vmem:[#allocation6 + $0x144] sm:$0xf]
    %v152 = vld [vmem:[#allocation6 + $0x148] sm:$0xf]
    %v153 = vld [vmem:[#allocation6 + $0x14c] sm:$0xf]
    %v154 = vld [vmem:[#allocation6 + $0x150] sm:$0xf]
    %v155 = vld [vmem:[#allocation6 + $0x154] sm:$0xf]
    %v156 = vld [vmem:[#allocation6 + $0x158] sm:$0xf]
    %v157 = vld [vmem:[#allocation6 + $0x15c] sm:$0xf]
    %v158 = vld [vmem:[#allocation6 + $0x160] sm:$0xf]
    %v159 = vld [vmem:[#allocation6 + $0x164] sm:$0xf]
    %v160 = vld [vmem:[#allocation6 + $0x168] sm:$0xf]
    %v161 = vld [vmem:[#allocation6 + $0x16c] sm:$0xf]
    %v162 = vld [vmem:[#allocation6 + $0x170] sm:$0xf]
    %v163 = vld [vmem:[#allocation6 + $0x174] sm:$0xf]
    %v164 = vld [vmem:[#allocation6 + $0x178] sm:$0xf]
    %v165 = vld [vmem:[#allocation6 + $0x17c] sm:$0xf]
    %v166 = vld [vmem:[#allocation6 + $0x180] sm:$0xf]
    %v167 = vld [vmem:[#allocation6 + $0x184] sm:$0xf]
    %v168 = vld [vmem:[#allocation6 + $0x188] sm:$0xf]
    %v169 = vld [vmem:[#allocation6 + $0x18c] sm:$0xf]
    %v170 = vld [vmem:[#allocation6 + $0x190] sm:$0xf]
    %v171 = vld [vmem:[#allocation6 + $0x194] sm:$0xf]
    %v172 = vld [vmem:[#allocation6 + $0x198] sm:$0xf]
    %v173 = vld [vmem:[#allocation6 + $0x19c] sm:$0xf]
    %v174 = vld [vmem:[#allocation6 + $0x1a0] sm:$0xf]
    %v175 = vld [vmem:[#allocation6 + $0x1a4] sm:$0xf]
    %v176 = vld [vmem:[#allocation6 + $0x1a8] sm:$0xf]
    %v177 = vld [vmem:[#allocation6 + $0x1ac] sm:$0xf]
    %v178 = vld [vmem:[#allocation6 + $0x1b0] sm:$0xf]
    %v179 = vld [vmem:[#allocation6 + $0x1b4] sm:$0xf]
    %v180 = vld [vmem:[#allocation6 + $0x1b8] sm:$0xf]
    %v181 = vld [vmem:[#allocation6 + $0x1bc] sm:$0xf]
    %v182 = vld [vmem:[#allocation6 + $0x1c0] sm:$0xf]
    %v183 = vld [vmem:[#allocation6 + $0x1c4] sm:$0xf]
    %v184 = vld [vmem:[#allocation6 + $0x1c8] sm:$0xf]
    %v185 = vld [vmem:[#allocation6 + $0x1cc] sm:$0xf]
    %v186 = vld [vmem:[#allocation6 + $0x1d0] sm:$0xf]
    %v187 = vld [vmem:[#allocation6 + $0x1d4] sm:$0xf]
    %v188 = vld [vmem:[#allocation6 + $0x1d8] sm:$0xf]
    %v189 = vld [vmem:[#allocation6 + $0x1dc] sm:$0xf]
    %v190 = vld [vmem:[#allocation6 + $0x1e0] sm:$0xf]
    %v191 = vld [vmem:[#allocation6 + $0x1e4] sm:$0xf]
    %v192 = vld [vmem:[#allocation6 + $0x1e8] sm:$0xf]
    %v193 = vld [vmem:[#allocation6 + $0x1ec] sm:$0xf]
    %v194 = vld [vmem:[#allocation6 + $0x1f0] sm:$0xf]
    %v195 = vld [vmem:[#allocation6 + $0x1f4] sm:$0xf]
    %v196 = vld [vmem:[#allocation6 + $0x1f8] sm:$0xf]
    %v197 = vld [vmem:[#allocation6 + $0x1fc] sm:$0xf]
    %v198 = vld [vmem:[%s2] sm:$0x1]
    %v200 = vlaneseq
    %v201 = vshrl.u32 %v200, 7
    %v202 = vsub.s32 0, %v201
    %v203 = vrot.slane %v198, %v202
    %v209 = vunpack.c.l.b16 %v66
    %v210 = vunpack.c.h.b16 %v66
    %v211 = vunpack.c.l.b16 %v67
    %v212 = vunpack.c.h.b16 %v67
    %v213 = vunpack.c.l.b16 %v68
    %v214 = vunpack.c.h.b16 %v68
    %v215 = vunpack.c.l.b16 %v69
    %v216 = vunpack.c.h.b16 %v69
    %v217 = vpack.c.b16 %v209, %v209
    %v218 = vpack.c.b16 %v210, %v210
    %v219 = vpack.c.b16 %v211, %v211
    %v220 = vpack.c.b16 %v212, %v212
    %v221 = vpack.c.b16 %v213, %v213
    %v222 = vpack.c.b16 %v214, %v214
    %v223 = vpack.c.b16 %v215, %v215
    %v224 = vpack.c.b16 %v216, %v216
    %v361 = vunpack.c.l.b16 %v70
    %v362 = vunpack.c.l.b16 %v71
    %v363 = vunpack.c.l.b16 %v72
    %v364 = vunpack.c.l.b16 %v73
    %v365 = vunpack.c.l.b16 %v74
    %v366 = vunpack.c.l.b16 %v75
    %v367 = vunpack.c.l.b16 %v76
    %v368 = vunpack.c.l.b16 %v77
    %v369 = vunpack.c.l.b16 %v78
    %v370 = vunpack.c.l.b16 %v79
    %v371 = vunpack.c.l.b16 %v80
    %v372 = vunpack.c.l.b16 %v81
    %v373 = vunpack.c.l.b16 %v82
    %v374 = vunpack.c.l.b16 %v83
    %v375 = vunpack.c.l.b16 %v84
    %v376 = vunpack.c.l.b16 %v85
    %v377 = vunpack.c.l.b16 %v86
    %v378 = vunpack.c.l.b16 %v87
    %v379 = vunpack.c.l.b16 %v88
    %v380 = vunpack.c.l.b16 %v89
    %v381 = vunpack.c.l.b16 %v90
    %v382 = vunpack.c.l.b16 %v91
    %v383 = vunpack.c.l.b16 %v92
    %v384 = vunpack.c.l.b16 %v93
    %v385 = vunpack.c.l.b16 %v94
    %v386 = vunpack.c.l.b16 %v95
    %v387 = vunpack.c.l.b16 %v96
    %v388 = vunpack.c.l.b16 %v97
    %v389 = vunpack.c.l.b16 %v98
    %v390 = vunpack.c.l.b16 %v99
    %v391 = vunpack.c.l.b16 %v100
    %v392 = vunpack.c.l.b16 %v101
    %v393 = vunpack.c.l.b16 %v102
    %v394 = vunpack.c.l.b16 %v103
    %v395 = vunpack.c.l.b16 %v104
    %v396 = vunpack.c.l.b16 %v105
    %v397 = vunpack.c.l.b16 %v106
    %v398 = vunpack.c.l.b16 %v107
    %v399 = vunpack.c.l.b16 %v108
    %v400 = vunpack.c.l.b16 %v109
    %v401 = vunpack.c.l.b16 %v110
    %v402 = vunpack.c.l.b16 %v111
    %v403 = vunpack.c.l.b16 %v112
    %v404 = vunpack.c.l.b16 %v113
    %v405 = vunpack.c.l.b16 %v114
    %v406 = vunpack.c.l.b16 %v115
    %v407 = vunpack.c.l.b16 %v116
    %v408 = vunpack.c.l.b16 %v117
    %v409 = vunpack.c.l.b16 %v118
    %v410 = vunpack.c.l.b16 %v119
    %v411 = vunpack.c.l.b16 %v120
    %v412 = vunpack.c.l.b16 %v121
    %v413 = vunpack.c.l.b16 %v122
    %v414 = vunpack.c.l.b16 %v123
    %v415 = vunpack.c.l.b16 %v124
    %v416 = vunpack.c.l.b16 %v125
    %v417 = vunpack.c.l.b16 %v126
    %v418 = vunpack.c.l.b16 %v127
    %v419 = vunpack.c.l.b16 %v128
    %v420 = vunpack.c.l.b16 %v129
    %v421 = vunpack.c.l.b16 %v130
    %v422 = vunpack.c.l.b16 %v131
    %v423 = vunpack.c.l.b16 %v132
    %v424 = vunpack.c.l.b16 %v133
    %v425 = vunpack.c.l.b16 %v134
    %v426 = vunpack.c.l.b16 %v135
    %v427 = vunpack.c.l.b16 %v136
    %v428 = vunpack.c.l.b16 %v137
    %v429 = vunpack.c.l.b16 %v138
    %v430 = vunpack.c.l.b16 %v139
    %v431 = vunpack.c.l.b16 %v140
    %v432 = vunpack.c.l.b16 %v141
    %v433 = vunpack.c.l.b16 %v142
    %v434 = vunpack.c.l.b16 %v143
    %v435 = vunpack.c.l.b16 %v144
    %v436 = vunpack.c.l.b16 %v145
    %v437 = vunpack.c.l.b16 %v146
    %v438 = vunpack.c.l.b16 %v147
    %v439 = vunpack.c.l.b16 %v148
    %v440 = vunpack.c.l.b16 %v149
    %v441 = vunpack.c.l.b16 %v150
    %v442 = vunpack.c.l.b16 %v151
    %v443 = vunpack.c.l.b16 %v152
    %v444 = vunpack.c.l.b16 %v153
    %v445 = vunpack.c.l.b16 %v154
    %v446 = vunpack.c.l.b16 %v155
    %v447 = vunpack.c.l.b16 %v156
    %v448 = vunpack.c.l.b16 %v157
    %v449 = vunpack.c.l.b16 %v158
    %v450 = vunpack.c.l.b16 %v159
    %v451 = vunpack.c.l.b16 %v160
    %v452 = vunpack.c.l.b16 %v161
    %v453 = vunpack.c.l.b16 %v162
    %v454 = vunpack.c.l.b16 %v163
    %v455 = vunpack.c.l.b16 %v164
    %v456 = vunpack.c.l.b16 %v165
    %v457 = vunpack.c.l.b16 %v166
    %v458 = vunpack.c.l.b16 %v167
    %v459 = vunpack.c.l.b16 %v168
    %v460 = vunpack.c.l.b16 %v169
    %v461 = vunpack.c.l.b16 %v170
    %v462 = vunpack.c.l.b16 %v171
    %v463 = vunpack.c.l.b16 %v172
    %v464 = vunpack.c.l.b16 %v173
    %v465 = vunpack.c.l.b16 %v174
    %v466 = vunpack.c.l.b16 %v175
    %v467 = vunpack.c.l.b16 %v176
    %v468 = vunpack.c.l.b16 %v177
    %v469 = vunpack.c.l.b16 %v178
    %v470 = vunpack.c.l.b16 %v179
    %v471 = vunpack.c.l.b16 %v180
    %v472 = vunpack.c.l.b16 %v181
    %v473 = vunpack.c.l.b16 %v182
    %v474 = vunpack.c.l.b16 %v183
    %v475 = vunpack.c.l.b16 %v184
    %v476 = vunpack.c.l.b16 %v185
    %v477 = vunpack.c.l.b16 %v186
    %v478 = vunpack.c.l.b16 %v187
    %v479 = vunpack.c.l.b16 %v188
    %v480 = vunpack.c.l.b16 %v189
    %v481 = vunpack.c.l.b16 %v190
    %v482 = vunpack.c.l.b16 %v191
    %v483 = vunpack.c.l.b16 %v192
    %v484 = vunpack.c.l.b16 %v193
    %v485 = vunpack.c.l.b16 %v194
    %v486 = vunpack.c.l.b16 %v195
    %v487 = vunpack.c.l.b16 %v196
    %v488 = vunpack.c.l.b16 %v197
    %v489 = vpack.c.b16 %v362, %v361
    %v490 = vpack.c.b16 %v364, %v363
    %v491 = vpack.c.b16 %v366, %v365
    %v492 = vpack.c.b16 %v368, %v367
    %v493 = vpack.c.b16 %v370, %v369
    %v494 = vpack.c.b16 %v372, %v371
    %v495 = vpack.c.b16 %v374, %v373
    %v496 = vpack.c.b16 %v376, %v375
    %v497 = vpack.c.b16 %v378, %v377
    %v498 = vpack.c.b16 %v380, %v379
    %v499 = vpack.c.b16 %v382, %v381
    %v500 = vpack.c.b16 %v384, %v383
    %v501 = vpack.c.b16 %v386, %v385
    %v502 = vpack.c.b16 %v388, %v387
    %v503 = vpack.c.b16 %v390, %v389
    %v504 = vpack.c.b16 %v392, %v391
    %v505 = vpack.c.b16 %v394, %v393
    %v506 = vpack.c.b16 %v396, %v395
    %v507 = vpack.c.b16 %v398, %v397
    %v508 = vpack.c.b16 %v400, %v399
    %v509 = vpack.c.b16 %v402, %v401
    %v510 = vpack.c.b16 %v404, %v403
    %v511 = vpack.c.b16 %v406, %v405
    %v512 = vpack.c.b16 %v408, %v407
    %v513 = vpack.c.b16 %v410, %v409
    %v514 = vpack.c.b16 %v412, %v411
    %v515 = vpack.c.b16 %v414, %v413
    %v516 = vpack.c.b16 %v416, %v415
    %v517 = vpack.c.b16 %v418, %v417
    %v518 = vpack.c.b16 %v420, %v419
    %v519 = vpack.c.b16 %v422, %v421
    %v520 = vpack.c.b16 %v424, %v423
    %v521 = vpack.c.b16 %v426, %v425
    %v522 = vpack.c.b16 %v428, %v427
    %v523 = vpack.c.b16 %v430, %v429
    %v524 = vpack.c.b16 %v432, %v431
    %v525 = vpack.c.b16 %v434, %v433
    %v526 = vpack.c.b16 %v436, %v435
    %v527 = vpack.c.b16 %v438, %v437
    %v528 = vpack.c.b16 %v440, %v439
    %v529 = vpack.c.b16 %v442, %v441
    %v530 = vpack.c.b16 %v444, %v443
    %v531 = vpack.c.b16 %v446, %v445
    %v532 = vpack.c.b16 %v448, %v447
    %v533 = vpack.c.b16 %v450, %v449
    %v534 = vpack.c.b16 %v452, %v451
    %v535 = vpack.c.b16 %v454, %v453
    %v536 = vpack.c.b16 %v456, %v455
    %v537 = vpack.c.b16 %v458, %v457
    %v538 = vpack.c.b16 %v460, %v459
    %v539 = vpack.c.b16 %v462, %v461
    %v540 = vpack.c.b16 %v464, %v463
    %v541 = vpack.c.b16 %v466, %v465
    %v542 = vpack.c.b16 %v468, %v467
    %v543 = vpack.c.b16 %v470, %v469
    %v544 = vpack.c.b16 %v472, %v471
    %v545 = vpack.c.b16 %v474, %v473
    %v546 = vpack.c.b16 %v476, %v475
    %v547 = vpack.c.b16 %v478, %v477
    %v548 = vpack.c.b16 %v480, %v479
    %v549 = vpack.c.b16 %v482, %v481
    %v550 = vpack.c.b16 %v484, %v483
    %v551 = vpack.c.b16 %v486, %v485
    %v552 = vpack.c.b16 %v488, %v487
    %617 = vmatprep.subr.bf16.mxu0 0
    %618 = vmatpush1.bf16.msra.mxu0 %v489
    %619 = vmatprep.subr.bf16.mxu0 0
    %620 = vmatpush1.bf16.msra.mxu0 %v490
    %621 = vmatprep.subr.bf16.mxu0 0
    %622 = vmatpush1.bf16.msra.mxu0 %v491
    %623 = vmatprep.subr.bf16.mxu0 0
    %624 = vmatpush1.bf16.msra.mxu0 %v492
    %625 = vmatprep.subr.bf16.mxu0 0
    %626 = vmatpush1.bf16.msra.mxu0 %v493
    %627 = vmatprep.subr.bf16.mxu0 0
    %628 = vmatpush1.bf16.msra.mxu0 %v494
    %629 = vmatprep.subr.bf16.mxu0 0
    %630 = vmatpush1.bf16.msra.mxu0 %v495
    %631 = vmatprep.subr.bf16.mxu0 0
    %632 = vmatpush1.bf16.msra.mxu0 %v496
    %633 = vmatprep.subr.bf16.mxu0 0
    %634 = vmatpush1.bf16.msra.mxu0 %v497
    %635 = vmatprep.subr.bf16.mxu0 0
    %636 = vmatpush1.bf16.msra.mxu0 %v498
    %637 = vmatprep.subr.bf16.mxu0 0
    %638 = vmatpush1.bf16.msra.mxu0 %v499
    %639 = vmatprep.subr.bf16.mxu0 0
    %640 = vmatpush1.bf16.msra.mxu0 %v500
    %641 = vmatprep.subr.bf16.mxu0 0
    %642 = vmatpush1.bf16.msra.mxu0 %v501
    %643 = vmatprep.subr.bf16.mxu0 0
    %644 = vmatpush1.bf16.msra.mxu0 %v502
    %645 = vmatprep.subr.bf16.mxu0 0
    %646 = vmatpush1.bf16.msra.mxu0 %v503
    %647 = vmatprep.subr.bf16.mxu0 0
    %648 = vmatpush1.bf16.msra.mxu0 %v504
    %649 = vmatprep.mubr.bf16.mxu0 %v218
    %650 = vmatmul.mubr.bf16.gmra.mrb[0].mxu0 %v217
    %v651 = vpop.f32.mrb[0].mxu0
    %v652 = vadd.f32 %v203, %v651
    %v653 = vpop.f32.mrb[0].mxu0
    %v654 = vpop.f32.mrb[0].mxu0
    %v655 = vpop.f32.mrb[0].mxu0
    %656 = vdwg.mxu0
    %657 = vmatprep.subr.bf16.mxu0 0
    %658 = vmatpush1.bf16.msra.mxu0 %v505
    %659 = vmatprep.subr.bf16.mxu0 0
    %660 = vmatpush1.bf16.msra.mxu0 %v506
    %661 = vmatprep.subr.bf16.mxu0 0
    %662 = vmatpush1.bf16.msra.mxu0 %v507
    %663 = vmatprep.subr.bf16.mxu0 0
    %664 = vmatpush1.bf16.msra.mxu0 %v508
    %665 = vmatprep.subr.bf16.mxu0 0
    %666 = vmatpush1.bf16.msra.mxu0 %v509
    %667 = vmatprep.subr.bf16.mxu0 0
    %668 = vmatpush1.bf16.msra.mxu0 %v510
    %669 = vmatprep.subr.bf16.mxu0 0
    %670 = vmatpush1.bf16.msra.mxu0 %v511
    %671 = vmatprep.subr.bf16.mxu0 0
    %672 = vmatpush1.bf16.msra.mxu0 %v512
    %673 = vmatprep.subr.bf16.mxu0 0
    %674 = vmatpush1.bf16.msra.mxu0 %v513
    %675 = vmatprep.subr.bf16.mxu0 0
    %676 = vmatpush1.bf16.msra.mxu0 %v514
    %677 = vmatprep.subr.bf16.mxu0 0
    %678 = vmatpush1.bf16.msra.mxu0 %v515
    %679 = vmatprep.subr.bf16.mxu0 0
    %680 = vmatpush1.bf16.msra.mxu0 %v516
    %681 = vmatprep.subr.bf16.mxu0 0
    %682 = vmatpush1.bf16.msra.mxu0 %v517
    %683 = vmatprep.subr.bf16.mxu0 0
    %684 = vmatpush1.bf16.msra.mxu0 %v518
    %685 = vmatprep.subr.bf16.mxu0 0
    %686 = vmatpush1.bf16.msra.mxu0 %v519
    %687 = vmatprep.subr.bf16.mxu0 0
    %688 = vmatpush1.bf16.msra.mxu0 %v520
    %689 = vmatprep.mubr.bf16.mxu0 %v220
    %690 = vmatmul.mubr.bf16.gmra.mrb[0].mxu0 %v219
    %v691 = vpop.f32.mrb[0].mxu0
    %v692 = vadd.f32 %v652, %v691
    %v693 = vpop.f32.mrb[0].mxu0
    %v694 = vpop.f32.mrb[0].mxu0
    %v695 = vpop.f32.mrb[0].mxu0
    %696 = vdwg.mxu0
    %697 = vmatprep.subr.bf16.mxu0 0
    %698 = vmatpush1.bf16.msra.mxu0 %v521
    %699 = vmatprep.subr.bf16.mxu0 0
    %700 = vmatpush1.bf16.msra.mxu0 %v522
    %701 = vmatprep.subr.bf16.mxu0 0
    %702 = vmatpush1.bf16.msra.mxu0 %v523
    %703 = vmatprep.subr.bf16.mxu0 0
    %704 = vmatpush1.bf16.msra.mxu0 %v524
    %705 = vmatprep.subr.bf16.mxu0 0
    %706 = vmatpush1.bf16.msra.mxu0 %v525
    %707 = vmatprep.subr.bf16.mxu0 0
    %708 = vmatpush1.bf16.msra.mxu0 %v526
    %709 = vmatprep.subr.bf16.mxu0 0
    %710 = vmatpush1.bf16.msra.mxu0 %v527
    %711 = vmatprep.subr.bf16.mxu0 0
    %712 = vmatpush1.bf16.msra.mxu0 %v528
    %713 = vmatprep.subr.bf16.mxu0 0
    %714 = vmatpush1.bf16.msra.mxu0 %v529
    %715 = vmatprep.subr.bf16.mxu0 0
    %716 = vmatpush1.bf16.msra.mxu0 %v530
    %717 = vmatprep.subr.bf16.mxu0 0
    %718 = vmatpush1.bf16.msra.mxu0 %v531
    %719 = vmatprep.subr.bf16.mxu0 0
    %720 = vmatpush1.bf16.msra.mxu0 %v532
    %721 = vmatprep.subr.bf16.mxu0 0
    %722 = vmatpush1.bf16.msra.mxu0 %v533
    %723 = vmatprep.subr.bf16.mxu0 0
    %724 = vmatpush1.bf16.msra.mxu0 %v534
    %725 = vmatprep.subr.bf16.mxu0 0
    %726 = vmatpush1.bf16.msra.mxu0 %v535
    %727 = vmatprep.subr.bf16.mxu0 0
    %728 = vmatpush1.bf16.msra.mxu0 %v536
    %729 = vmatprep.mubr.bf16.mxu0 %v222
    %730 = vmatmul.mubr.bf16.gmra.mrb[0].mxu0 %v221
    %v731 = vpop.f32.mrb[0].mxu0
    %v732 = vadd.f32 %v692, %v731
    %v733 = vpop.f32.mrb[0].mxu0
    %v734 = vpop.f32.mrb[0].mxu0
    %v735 = vpop.f32.mrb[0].mxu0
    %736 = vdwg.mxu0
    %737 = vmatprep.subr.bf16.mxu0 0
    %738 = vmatpush1.bf16.msra.mxu0 %v537
    %739 = vmatprep.subr.bf16.mxu0 0
    %740 = vmatpush1.bf16.msra.mxu0 %v538
    %741 = vmatprep.subr.bf16.mxu0 0
    %742 = vmatpush1.bf16.msra.mxu0 %v539
    %743 = vmatprep.subr.bf16.mxu0 0
    %744 = vmatpush1.bf16.msra.mxu0 %v540
    %745 = vmatprep.subr.bf16.mxu0 0
    %746 = vmatpush1.bf16.msra.mxu0 %v541
    %747 = vmatprep.subr.bf16.mxu0 0
    %748 = vmatpush1.bf16.msra.mxu0 %v542
    %749 = vmatprep.subr.bf16.mxu0 0
    %750 = vmatpush1.bf16.msra.mxu0 %v543
    %751 = vmatprep.subr.bf16.mxu0 0
    %752 = vmatpush1.bf16.msra.mxu0 %v544
    %753 = vmatprep.subr.bf16.mxu0 0
    %754 = vmatpush1.bf16.msra.mxu0 %v545
    %755 = vmatprep.subr.bf16.mxu0 0
    %756 = vmatpush1.bf16.msra.mxu0 %v546
    %757 = vmatprep.subr.bf16.mxu0 0
    %758 = vmatpush1.bf16.msra.mxu0 %v547
    %759 = vmatprep.subr.bf16.mxu0 0
    %760 = vmatpush1.bf16.msra.mxu0 %v548
    %761 = vmatprep.subr.bf16.mxu0 0
    %762 = vmatpush1.bf16.msra.mxu0 %v549
    %763 = vmatprep.subr.bf16.mxu0 0
    %764 = vmatpush1.bf16.msra.mxu0 %v550
    %765 = vmatprep.subr.bf16.mxu0 0
    %766 = vmatpush1.bf16.msra.mxu0 %v551
    %767 = vmatprep.subr.bf16.mxu0 0
    %768 = vmatpush1.bf16.msra.mxu0 %v552
    %769 = vmatprep.mubr.bf16.mxu0 %v224
    %770 = vmatmul.mubr.bf16.gmra.mrb[0].mxu0 %v223
    %v771 = vpop.f32.mrb[0].mxu0
    %v772 = vadd.f32 %v732, %v771
    %v773 = vpop.f32.mrb[0].mxu0
    %v774 = vpop.f32.mrb[0].mxu0
    %v775 = vpop.f32.mrb[0].mxu0
    %776 = vdwg.mxu0
    %v777 = vmax.f32 %v772, 0.0
    %v778 = vld [vmem:[#allocation2] sm:$0xff]
    %v779 = vpack.c.bf16 %v777, %v777
    %v780 = vld [vmem:[#allocation8] sm:$0xf]
    %v781 = vld [vmem:[#allocation8 + $0x4] sm:$0xf]
    %v782 = vld [vmem:[#allocation8 + $0x8] sm:$0xf]
    %v783 = vld [vmem:[#allocation8 + $0xc] sm:$0xf]
    %v784 = vld [vmem:[#allocation8 + $0x10] sm:$0xf]
    %v785 = vld [vmem:[#allocation8 + $0x14] sm:$0xf]
    %v786 = vld [vmem:[#allocation8 + $0x18] sm:$0xf]
    %v787 = vld [vmem:[#allocation8 + $0x1c] sm:$0xf]
    %v788 = vld [vmem:[#allocation8 + $0x20] sm:$0xf]
    %v789 = vld [vmem:[#allocation8 + $0x24] sm:$0xf]
    %v790 = vld [vmem:[#allocation8 + $0x28] sm:$0xf]
    %v791 = vld [vmem:[#allocation8 + $0x2c] sm:$0xf]
    %v792 = vld [vmem:[#allocation8 + $0x30] sm:$0xf]
    %v793 = vld [vmem:[#allocation8 + $0x34] sm:$0xf]
    %v794 = vld [vmem:[#allocation8 + $0x38] sm:$0xf]
    %v795 = vld [vmem:[#allocation8 + $0x3c] sm:$0xf]
    %v812 = vunpack.c.l.b16 %v780
    %v813 = vunpack.c.l.b16 %v781
    %v814 = vunpack.c.l.b16 %v782
    %v815 = vunpack.c.l.b16 %v783
    %v816 = vunpack.c.l.b16 %v784
    %v817 = vunpack.c.l.b16 %v785
    %v818 = vunpack.c.l.b16 %v786
    %v819 = vunpack.c.l.b16 %v787
    %v820 = vunpack.c.l.b16 %v788
    %v821 = vunpack.c.l.b16 %v789
    %v822 = vunpack.c.l.b16 %v790
    %v823 = vunpack.c.l.b16 %v791
    %v824 = vunpack.c.l.b16 %v792
    %v825 = vunpack.c.l.b16 %v793
    %v826 = vunpack.c.l.b16 %v794
    %v827 = vunpack.c.l.b16 %v795
    %v828 = vpack.c.b16 %v813, %v812
    %v829 = vpack.c.b16 %v815, %v814
    %v830 = vpack.c.b16 %v817, %v816
    %v831 = vpack.c.b16 %v819, %v818
    %v832 = vpack.c.b16 %v821, %v820
    %v833 = vpack.c.b16 %v823, %v822
    %v834 = vpack.c.b16 %v825, %v824
    %v835 = vpack.c.b16 %v827, %v826
    %844 = vmatprep.subr.bf16.mxu0 0
    %845 = vmatpush1.bf16.msra.mxu0 %v828
    %846 = vmatprep.subr.bf16.mxu0 0
    %847 = vmatpush1.bf16.msra.mxu0 %v829
    %848 = vmatprep.subr.bf16.mxu0 0
    %849 = vmatpush1.bf16.msra.mxu0 %v830
    %850 = vmatprep.subr.bf16.mxu0 0
    %851 = vmatpush1.bf16.msra.mxu0 %v831
    %852 = vmatprep.subr.bf16.mxu0 0
    %853 = vmatpush1.bf16.msra.mxu0 %v832
    %854 = vmatprep.subr.bf16.mxu0 0
    %855 = vmatpush1.bf16.msra.mxu0 %v833
    %856 = vmatprep.subr.bf16.mxu0 0
    %857 = vmatpush1.bf16.msra.mxu0 %v834
    %858 = vmatprep.subr.bf16.mxu0 0
    %859 = vmatpush1.bf16.msra.mxu0 %v835
    %860 = vmatprep.subr.bf16.mxu0 0
    %861 = vmatpush1.bf16.msra.mxu0 0
    %862 = vmatprep.subr.bf16.mxu0 0
    %863 = vmatpush1.bf16.msra.mxu0 0
    %864 = vmatprep.subr.bf16.mxu0 0
    %865 = vmatpush1.bf16.msra.mxu0 0
    %866 = vmatprep.subr.bf16.mxu0 0
    %867 = vmatpush1.bf16.msra.mxu0 0
    %868 = vmatprep.subr.bf16.mxu0 0
    %869 = vmatpush1.bf16.msra.mxu0 0
    %870 = vmatprep.subr.bf16.mxu0 0
    %871 = vmatpush1.bf16.msra.mxu0 0
    %872 = vmatprep.subr.bf16.mxu0 0
    %873 = vmatpush1.bf16.msra.mxu0 0
    %874 = vmatprep.subr.bf16.mxu0 0
    %875 = vmatpush1.bf16.msra.mxu0 0
    %876 = vmatprep.mubr.bf16.mxu0 0
    %877 = vmatmul.mubr.bf16.gmra.mrb[0].mxu0 %v779
    %v878 = vpop.f32.mrb[0].mxu0
    %v879 = vadd.f32 0.0, %v878
    %v880 = vpop.f32.mrb[0].mxu0
    %v881 = vpop.f32.mrb[0].mxu0
    %v882 = vpop.f32.mrb[0].mxu0
    %883 = vdwg.mxu0
    %v884 = vadd.f32 %v778, %v879
    %885 = vst [vmem:[#allocation2] sm:$0xff] %v884
    // Predicated region
    $region38: #{tpu_custom_call.1} parent=1 // pred_check
      %p886 = pneg %p61
    $region39: #{tpu_custom_call.1} parent=1 // pred_check_branch
      %888 = sbr.rel (%p886) target = $region41
    $region40: #{tpu_custom_call.1} parent=1 // pred_region
      %v889 = vld [vmem:[#allocation2] sm:$0xff]
      %v890 = vld [vmem:[%s4] sm:$0x1]
      %v892 = vlaneseq
      %v893 = vshrl.u32 %v892, 7
      %v894 = vsub.s32 0, %v893
      %v895 = vrot.slane %v890, %v894
      %v897 = vadd.f32 %v889, %v895
      %898 = vst [vmem:[#allocation9] sm:$0xff] %v897
    $region41: #{tpu_custom_call.1} parent=1 // pred_fallthru
      _
    // Predicated region
    $region42: #{tpu_custom_call.1} parent=1 // pred_check
      _
    $region43: #{tpu_custom_call.1} parent=1 // pred_check_branch
      %900 = sbr.rel (0) target = $region45
    $region44: #{tpu_custom_call.1} parent=1 // pred_region
      %s902 = ssub.s32 128, 128
      %903 = vsyncadd [#allocation5], %s902
      %s905 = sshll.u32 [#allocation9], 4
      %s906 = int_to_ptr.vmem [resolvable:$true] %s905
      %908 = dma.vmem_to_hbm [thread:$0]  %s906, 128, %s5, [#allocation5]
    $region45: #{tpu_custom_call.1} parent=1 // pred_fallthru
      _
    // Predicated region
    $region46: #{tpu_custom_call.1} parent=1 // pred_check
      _
    $region47: #{tpu_custom_call.1} parent=1 // pred_check_branch
      %910 = sbr.rel (0) target = $region49
    $region48: #{tpu_custom_call.1} parent=1 // pred_region
      %911 = dma.done [#allocation5], 128
    $region49: #{tpu_custom_call.1} parent=1 // pred_fallthru
      _
    %912 = vsyncpa [#allocation4], 1
    %913 = vsyncpa [#allocation7], 1
    %914 = vsyncpa [#allocation5], 1

// kernel: tpu_custom_call.1
$region0: #{tpu_custom_call.1}
  #allocation0 [shape = 'u32[]', space=smem, size = 0x4, offset = 0x4, fixed_abs, tag = 'smem constant byte address 0x4 - core index']
  #allocation1 [shape = 'u32[144,128]{1,0:T(1,128)}', space=vmem, size = 0x12000, scoped, tag = 'internal scratch']
  #allocation2 [shape = 'f32[8,128]{1,0:T(8,128)}', space=vmem, size = 0x1000, scoped, tag = 'scratch operand']
  %s0 = inlined_call_operand.hbm [shape: bf16[8,1024], index: 0, kind: input, shape index: {}]
  %s1 = inlined_call_operand.hbm [shape: bf16[1024,128], index: 1, kind: input, shape index: {}]
  %s2 = inlined_call_operand.vmem [shape: f32[1,128], index: 2, kind: input, shape index: {}]
  %s3 = inlined_call_operand.hbm [shape: bf16[128,128], index: 3, kind: input, shape index: {}]
  %s4 = inlined_call_operand.vmem [shape: f32[1,128], index: 4, kind: input, shape index: {}]
  %s5 = inlined_call_operand.hbm [shape: f32[8,128], index: 5, kind: output, shape index: {}]
  %s6 = sld [smem:[#allocation0]]
  $region50: #{tpu_custom_call.1} parent=0
    _
  %s8 = ssub.s32 1, %s6
  %s9 = scalar_select 0, %s8, %s6
  $region1: #{tpu_custom_call.1} parent=0
    #allocation3 [shape = 'u8[16384]{0}', space=vmem, size = 0x4000, scoped, tag = 'input window, operand 0, single buffered']
    #allocation4 [shape = 's32[1]{0}', space=sflag, size = 0x4, scoped, tag = 'scoped memory for tpu_custom_call.1']
    #allocation5 [shape = 's32[1]{0}', space=sflag, size = 0x4, scoped, tag = 'scoped memory for tpu_custom_call.1']
    #allocation6 [shape = 'u8[262144]{0}', space=vmem, size = 0x40000, scoped, tag = 'input window, operand 1, single buffered']
    #allocation7 [shape = 's32[1]{0}', space=sflag, size = 0x4, scoped, tag = 'scoped memory for tpu_custom_call.1']
    #allocation8 [shape = 'u8[32768]{0}', space=vmem, size = 0x8000, scoped, tag = 'input window, operand 3, single buffered']
    #allocation9 [shape = 'u8[4096]{0}', space=vmem, size = 0x1000, scoped, tag = 'output window, operand 0, single buffered']
    %10 = vsyncpa [#allocation4], 0
    %11 = vsyncpa [#allocation7], 0
    %12 = vsyncpa [#allocation5], 0
    // Predicated region
    $region2: #{tpu_custom_call.1} parent=1 // pred_check
      _
    $region3: #{tpu_custom_call.1} parent=1 // pred_check_branch
      %14 = sbr.rel (0) target = $region5
    $region4: #{tpu_custom_call.1} parent=1 // pred_region
      %s16 = ssub.s32 512, 512
      %17 = vsyncadd [#allocation4], %s16
      %s19 = sshll.u32 [#allocation3], 4
      %s20 = int_to_ptr.vmem [resolvable:$true] %s19
      %22 = dma.hbm_to_vmem [thread:$0]  %s0, 512, %s20, [#allocation4]
    $region5: #{tpu_custom_call.1} parent=1 // pred_fallthru
      _
    // Predicated region
    $region6: #{tpu_custom_call.1} parent=1 // pred_check
      _
    $region7: #{tpu_custom_call.1} parent=1 // pred_check_branch
      %24 = sbr.rel (0) target = $region9
    $region8: #{tpu_custom_call.1} parent=1 // pred_region
      %s26 = ssub.s32 8192, 8192
      %27 = vsyncadd [#allocation7], %s26
      %s28 = sshll.u32 [#allocation6], 4
      %s29 = int_to_ptr.vmem [resolvable:$true] %s28
      %34 = dma.hbm_to_vmem [thread:$0]  %s1, 8192, %s29, [#allocation7], 64, 64, 4
    $region9: #{tpu_custom_call.1} parent=1 // pred_fallthru
      _
    // Predicated region
    $region10: #{tpu_custom_call.1} parent=1 // pred_check
      _
    $region11: #{tpu_custom_call.1} parent=1 // pred_check_branch
      %36 = sbr.rel (0) target = $region13
    $region12: #{tpu_custom_call.1} parent=1 // pred_region
      _
    $region13: #{tpu_custom_call.1} parent=1 // pred_fallthru
      _
    // Predicated region
    $region14: #{tpu_custom_call.1} parent=1 // pred_check
      _
    $region15: #{tpu_custom_call.1} parent=1 // pred_check_branch
      %38 = sbr.rel (0) target = $region17
    $region16: #{tpu_custom_call.1} parent=1 // pred_region
      %s40 = ssub.s32 1024, 1024
      %41 = vsyncadd [#allocation7], %s40
      %s42 = sshll.u32 [#allocation8], 4
      %s43 = int_to_ptr.vmem [resolvable:$true] %s42
      %48 = dma.hbm_to_vmem [thread:$0]  %s3, 1024, %s43, [#allocation7], 64, 64, 4
    $region17: #{tpu_custom_call.1} parent=1 // pred_fallthru
      _
    // Predicated region
    $region18: #{tpu_custom_call.1} parent=1 // pred_check
      _
    $region19: #{tpu_custom_call.1} parent=1 // pred_check_branch
      %50 = sbr.rel (0) target = $region21
    $region20: #{tpu_custom_call.1} parent=1 // pred_region
      _
    $region21: #{tpu_custom_call.1} parent=1 // pred_fallthru
      _
    // Predicated region
    $region22: #{tpu_custom_call.1} parent=1 // pred_check
      _
    $region23: #{tpu_custom_call.1} parent=1 // pred_check_branch
      %52 = sbr.rel (0) target = $region25
    $region24: #{tpu_custom_call.1} parent=1 // pred_region
      %53 = dma.done [#allocation4], 512
    $region25: #{tpu_custom_call.1} parent=1 // pred_fallthru
      _
    // Predicated region
    $region26: #{tpu_custom_call.1} parent=1 // pred_check
      _
    $region27: #{tpu_custom_call.1} parent=1 // pred_check_branch
      %55 = sbr.rel (0) target = $region29
    $region28: #{tpu_custom_call.1} parent=1 // pred_region
      %56 = dma.done [#allocation7], 8192
    $region29: #{tpu_custom_call.1} parent=1 // pred_fallthru
      _
    // Predicated region
    $region30: #{tpu_custom_call.1} parent=1 // pred_check
      _
    $region31: #{tpu_custom_call.1} parent=1 // pred_check_branch
      %58 = sbr.rel (0) target = $region33
    $region32: #{tpu_custom_call.1} parent=1 // pred_region
      %59 = dma.done [#allocation7], 1024
    $region33: #{tpu_custom_call.1} parent=1 // pred_fallthru
      _
    %p61 = scmp.eq.s32.totalorder 0, 0
    // Predicated region
    $region34: #{tpu_custom_call.1} parent=1 // pred_check
      %p62 = pneg %p61
    $region35: #{tpu_custom_call.1} parent=1 // pred_check_branch
      %64 = sbr.rel (%p62) target = $region37
    $region36: #{tpu_custom_call.1} parent=1 // pred_region
      %65 = vst [vmem:[#allocation2] sm:$0xff] 0.0
    $region37: #{tpu_custom_call.1} parent=1 // pred_fallthru
      _
    %v66 = vld [vmem:[#allocation3] sm:$0xff]
    %v67 = vld [vmem:[#allocation3 + $0x8] sm:$0xff]
    %v68 = vld [vmem:[#allocation3 + $0x10] sm:$0xff]
    %v69 = vld [vmem:[#allocation3 + $0x18] sm:$0xff]
    %v70 = vld [vmem:[#allocation6] sm:$0xf]
    %v71 = vld [vmem:[#allocation6 + $0x4] sm:$0xf]
    %v72 = vld [vmem:[#allocation6 + $0x8] sm:$0xf]
    %v73 = vld [vmem:[#allocation6 + $0xc] sm:$0xf]
    %v74 = vld [vmem:[#allocation6 + $0x10] sm:$0xf]
    %v75 = vld [vmem:[#allocation6 + $0x14] sm:$0xf]
    %v76 = vld [vmem:[#allocation6 + $0x18] sm:$0xf]
    %v77 = vld [vmem:[#allocation6 + $0x1c] sm:$0xf]
    %v78 = vld [vmem:[#allocation6 + $0x20] sm:$0xf]
    %v79 = vld [vmem:[#allocation6 + $0x24] sm:$0xf]
    %v80 = vld [vmem:[#allocation6 + $0x28] sm:$0xf]
    %v81 = vld [vmem:[#allocation6 + $0x2c] sm:$0xf]
    %v82 = vld [vmem:[#allocation6 + $0x30] sm:$0xf]
    %v83 = vld [vmem:[#allocation6 + $0x34] sm:$0xf]
    %v84 = vld [vmem:[#allocation6 + $0x38] sm:$0xf]
    %v85 = vld [vmem:[#allocation6 + $0x3c] sm:$0xf]
    %v86 = vld [vmem:[#allocation6 + $0x40] sm:$0xf]
    %v87 = vld [vmem:[#allocation6 + $0x44] sm:$0xf]
    %v88 = vld [vmem:[#allocation6 + $0x48] sm:$0xf]
    %v89 = vld [vmem:[#allocation6 + $0x4c] sm:$0xf]
    %v90 = vld [vmem:[#allocation6 + $0x50] sm:$0xf]
    %v91 = vld [vmem:[#allocation6 + $0x54] sm:$0xf]
    %v92 = vld [vmem:[#allocation6 + $0x58] sm:$0xf]
    %v93 = vld [vmem:[#allocation6 + $0x5c] sm:$0xf]
    %v94 = vld [vmem:[#allocation6 + $0x60] sm:$0xf]
    %v95 = vld [vmem:[#allocation6 + $0x64] sm:$0xf]
    %v96 = vld [vmem:[#allocation6 + $0x68] sm:$0xf]
    %v97 = vld [vmem:[#allocation6 + $0x6c] sm:$0xf]
    %v98 = vld [vmem:[#allocation6 + $0x70] sm:$0xf]
    %v99 = vld [vmem:[#allocation6 + $0x74] sm:$0xf]
    %v100 = vld [vmem:[#allocation6 + $0x78] sm:$0xf]
    %v101 = vld [vmem:[#allocation6 + $0x7c] sm:$0xf]
    %v102 = vld [vmem:[#allocation6 + $0x80] sm:$0xf]
    %v103 = vld [vmem:[#allocation6 + $0x84] sm:$0xf]
    %v104 = vld [vmem:[#allocation6 + $0x88] sm:$0xf]
    %v105 = vld [vmem:[#allocation6 + $0x8c] sm:$0xf]
    %v106 = vld [vmem:[#allocation6 + $0x90] sm:$0xf]
    %v107 = vld [vmem:[#allocation6 + $0x94] sm:$0xf]
    %v108 = vld [vmem:[#allocation6 + $0x98] sm:$0xf]
    %v109 = vld [vmem:[#allocation6 + $0x9c] sm:$0xf]
    %v110 = vld [vmem:[#allocation6 + $0xa0] sm:$0xf]
    %v111 = vld [vmem:[#allocation6 + $0xa4] sm:$0xf]
    %v112 = vld [vmem:[#allocation6 + $0xa8] sm:$0xf]
    %v113 = vld [vmem:[#allocation6 + $0xac] sm:$0xf]
    %v114 = vld [vmem:[#allocation6 + $0xb0] sm:$0xf]
    %v115 = vld [vmem:[#allocation6 + $0xb4] sm:$0xf]
    %v116 = vld [vmem:[#allocation6 + $0xb8] sm:$0xf]
    %v117 = vld [vmem:[#allocation6 + $0xbc] sm:$0xf]
    %v118 = vld [vmem:[#allocation6 + $0xc0] sm:$0xf]
    %v119 = vld [vmem:[#allocation6 + $0xc4] sm:$0xf]
    %v120 = vld [vmem:[#allocation6 + $0xc8] sm:$0xf]
    %v121 = vld [vmem:[#allocation6 + $0xcc] sm:$0xf]
    %v122 = vld [vmem:[#allocation6 + $0xd0] sm:$0xf]
    %v123 = vld [vmem:[#allocation6 + $0xd4] sm:$0xf]
    %v124 = vld [vmem:[#allocation6 + $0xd8] sm:$0xf]
    %v125 = vld [vmem:[#allocation6 + $0xdc] sm:$0xf]
    %v126 = vld [vmem:[#allocation6 + $0xe0] sm:$0xf]
    %v127 = vld [vmem:[#allocation6 + $0xe4] sm:$0xf]
    %v128 = vld [vmem:[#allocation6 + $0xe8] sm:$0xf]
    %v129 = vld [vmem:[#allocation6 + $0xec] sm:$0xf]
    %v130 = vld [vmem:[#allocation6 + $0xf0] sm:$0xf]
    %v131 = vld [vmem:[#allocation6 + $0xf4] sm:$0xf]
    %v132 = vld [vmem:[#allocation6 + $0xf8] sm:$0xf]
    %v133 = vld [vmem:[#allocation6 + $0xfc] sm:$0xf]
    %v134 = vld [vmem:[#allocation6 + $0x100] sm:$0xf]
    %v135 = vld [vmem:[#allocation6 + $0x104] sm:$0xf]
    %v136 = vld [vmem:[#allocation6 + $0x108] sm:$0xf]
    %v137 = vld [vmem:[#allocation6 + $0x10c] sm:$0xf]
    %v138 = vld [vmem:[#allocation6 + $0x110] sm:$0xf]
    %v139 = vld [vmem:[#allocation6 + $0x114] sm:$0xf]
    %v140 = vld [vmem:[#allocation6 + $0x118] sm:$0xf]
    %v141 = vld [vmem:[#allocation6 + $0x11c] sm:$0xf]
    %v142 = vld [vmem:[#allocation6 + $0x120] sm:$0xf]
    %v143 = vld [vmem:[#allocation6 + $0x124] sm:$0xf]
    %v144 = vld [vmem:[#allocation6 + $0x128] sm:$0xf]
    %v145 = vld [vmem:[#allocation6 + $0x12c] sm:$0xf]
    %v146 = vld [vmem:[#allocation6 + $0x130] sm:$0xf]
    %v147 = vld [vmem:[#allocation6 + $0x134] sm:$0xf]
    %v148 = vld [vmem:[#allocation6 + $0x138] sm:$0xf]
    %v149 = vld [vmem:[#allocation6 + $0x13c] sm:$0xf]
    %v150 = vld [vmem:[#allocation6 + $0x140] sm:$0xf]
    %v151 = vld [vmem:[#allocation6 + $0x144] sm:$0xf]
    %v152 = vld [vmem:[#allocation6 + $0x148] sm:$0xf]
    %v153 = vld [vmem:[#allocation6 + $0x14c] sm:$0xf]
    %v154 = vld [vmem:[#allocation6 + $0x150] sm:$0xf]
    %v155 = vld [vmem:[#allocation6 + $0x154] sm:$0xf]
    %v156 = vld [vmem:[#allocation6 + $0x158] sm:$0xf]
    %v157 = vld [vmem:[#allocation6 + $0x15c] sm:$0xf]
    %v158 = vld [vmem:[#allocation6 + $0x160] sm:$0xf]
    %v159 = vld [vmem:[#allocation6 + $0x164] sm:$0xf]
    %v160 = vld [vmem:[#allocation6 + $0x168] sm:$0xf]
    %v161 = vld [vmem:[#allocation6 + $0x16c] sm:$0xf]
    %v162 = vld [vmem:[#allocation6 + $0x170] sm:$0xf]
    %v163 = vld [vmem:[#allocation6 + $0x174] sm:$0xf]
    %v164 = vld [vmem:[#allocation6 + $0x178] sm:$0xf]
    %v165 = vld [vmem:[#allocation6 + $0x17c] sm:$0xf]
    %v166 = vld [vmem:[#allocation6 + $0x180] sm:$0xf]
    %v167 = vld [vmem:[#allocation6 + $0x184] sm:$0xf]
    %v168 = vld [vmem:[#allocation6 + $0x188] sm:$0xf]
    %v169 = vld [vmem:[#allocation6 + $0x18c] sm:$0xf]
    %v170 = vld [vmem:[#allocation6 + $0x190] sm:$0xf]
    %v171 = vld [vmem:[#allocation6 + $0x194] sm:$0xf]
    %v172 = vld [vmem:[#allocation6 + $0x198] sm:$0xf]
    %v173 = vld [vmem:[#allocation6 + $0x19c] sm:$0xf]
    %v174 = vld [vmem:[#allocation6 + $0x1a0] sm:$0xf]
    %v175 = vld [vmem:[#allocation6 + $0x1a4] sm:$0xf]
    %v176 = vld [vmem:[#allocation6 + $0x1a8] sm:$0xf]
    %v177 = vld [vmem:[#allocation6 + $0x1ac] sm:$0xf]
    %v178 = vld [vmem:[#allocation6 + $0x1b0] sm:$0xf]
    %v179 = vld [vmem:[#allocation6 + $0x1b4] sm:$0xf]
    %v180 = vld [vmem:[#allocation6 + $0x1b8] sm:$0xf]
    %v181 = vld [vmem:[#allocation6 + $0x1bc] sm:$0xf]
    %v182 = vld [vmem:[#allocation6 + $0x1c0] sm:$0xf]
    %v183 = vld [vmem:[#allocation6 + $0x1c4] sm:$0xf]
    %v184 = vld [vmem:[#allocation6 + $0x1c8] sm:$0xf]
    %v185 = vld [vmem:[#allocation6 + $0x1cc] sm:$0xf]
    %v186 = vld [vmem:[#allocation6 + $0x1d0] sm:$0xf]
    %v187 = vld [vmem:[#allocation6 + $0x1d4] sm:$0xf]
    %v188 = vld [vmem:[#allocation6 + $0x1d8] sm:$0xf]
    %v189 = vld [vmem:[#allocation6 + $0x1dc] sm:$0xf]
    %v190 = vld [vmem:[#allocation6 + $0x1e0] sm:$0xf]
    %v191 = vld [vmem:[#allocation6 + $0x1e4] sm:$0xf]
    %v192 = vld [vmem:[#allocation6 + $0x1e8] sm:$0xf]
    %v193 = vld [vmem:[#allocation6 + $0x1ec] sm:$0xf]
    %v194 = vld [vmem:[#allocation6 + $0x1f0] sm:$0xf]
    %v195 = vld [vmem:[#allocation6 + $0x1f4] sm:$0xf]
    %v196 = vld [vmem:[#allocation6 + $0x1f8] sm:$0xf]
    %v197 = vld [vmem:[#allocation6 + $0x1fc] sm:$0xf]
    %v198 = vld [vmem:[%s2] sm:$0x1]
    %v200 = vlaneseq
    %v201 = vshrl.u32 %v200, 7
    %v202 = vsub.s32 0, %v201
    %v203 = vrot.slane %v198, %v202
    %v209 = vunpack.c.l.b16 %v66
    %v210 = vunpack.c.h.b16 %v66
    %v211 = vunpack.c.l.b16 %v67
    %v212 = vunpack.c.h.b16 %v67
    %v213 = vunpack.c.l.b16 %v68
    %v214 = vunpack.c.h.b16 %v68
    %v215 = vunpack.c.l.b16 %v69
    %v216 = vunpack.c.h.b16 %v69
    %v217 = vpack.c.b16 %v209, %v209
    %v218 = vpack.c.b16 %v210, %v210
    %v219 = vpack.c.b16 %v211, %v211
    %v220 = vpack.c.b16 %v212, %v212
    %v221 = vpack.c.b16 %v213, %v213
    %v222 = vpack.c.b16 %v214, %v214
    %v223 = vpack.c.b16 %v215, %v215
    %v224 = vpack.c.b16 %v216, %v216
    %v361 = vunpack.c.l.b16 %v70
    %v362 = vunpack.c.l.b16 %v71
    %v363 = vunpack.c.l.b16 %v72
    %v364 = vunpack.c.l.b16 %v73
    %v365 = vunpack.c.l.b16 %v74
    %v366 = vunpack.c.l.b16 %v75
    %v367 = vunpack.c.l.b16 %v76
    %v368 = vunpack.c.l.b16 %v77
    %v369 = vunpack.c.l.b16 %v78
    %v370 = vunpack.c.l.b16 %v79
    %v371 = vunpack.c.l.b16 %v80
    %v372 = vunpack.c.l.b16 %v81
    %v373 = vunpack.c.l.b16 %v82
    %v374 = vunpack.c.l.b16 %v83
    %v375 = vunpack.c.l.b16 %v84
    %v376 = vunpack.c.l.b16 %v85
    %v377 = vunpack.c.l.b16 %v86
    %v378 = vunpack.c.l.b16 %v87
    %v379 = vunpack.c.l.b16 %v88
    %v380 = vunpack.c.l.b16 %v89
    %v381 = vunpack.c.l.b16 %v90
    %v382 = vunpack.c.l.b16 %v91
    %v383 = vunpack.c.l.b16 %v92
    %v384 = vunpack.c.l.b16 %v93
    %v385 = vunpack.c.l.b16 %v94
    %v386 = vunpack.c.l.b16 %v95
    %v387 = vunpack.c.l.b16 %v96
    %v388 = vunpack.c.l.b16 %v97
    %v389 = vunpack.c.l.b16 %v98
    %v390 = vunpack.c.l.b16 %v99
    %v391 = vunpack.c.l.b16 %v100
    %v392 = vunpack.c.l.b16 %v101
    %v393 = vunpack.c.l.b16 %v102
    %v394 = vunpack.c.l.b16 %v103
    %v395 = vunpack.c.l.b16 %v104
    %v396 = vunpack.c.l.b16 %v105
    %v397 = vunpack.c.l.b16 %v106
    %v398 = vunpack.c.l.b16 %v107
    %v399 = vunpack.c.l.b16 %v108
    %v400 = vunpack.c.l.b16 %v109
    %v401 = vunpack.c.l.b16 %v110
    %v402 = vunpack.c.l.b16 %v111
    %v403 = vunpack.c.l.b16 %v112
    %v404 = vunpack.c.l.b16 %v113
    %v405 = vunpack.c.l.b16 %v114
    %v406 = vunpack.c.l.b16 %v115
    %v407 = vunpack.c.l.b16 %v116
    %v408 = vunpack.c.l.b16 %v117
    %v409 = vunpack.c.l.b16 %v118
    %v410 = vunpack.c.l.b16 %v119
    %v411 = vunpack.c.l.b16 %v120
    %v412 = vunpack.c.l.b16 %v121
    %v413 = vunpack.c.l.b16 %v122
    %v414 = vunpack.c.l.b16 %v123
    %v415 = vunpack.c.l.b16 %v124
    %v416 = vunpack.c.l.b16 %v125
    %v417 = vunpack.c.l.b16 %v126
    %v418 = vunpack.c.l.b16 %v127
    %v419 = vunpack.c.l.b16 %v128
    %v420 = vunpack.c.l.b16 %v129
    %v421 = vunpack.c.l.b16 %v130
    %v422 = vunpack.c.l.b16 %v131
    %v423 = vunpack.c.l.b16 %v132
    %v424 = vunpack.c.l.b16 %v133
    %v425 = vunpack.c.l.b16 %v134
    %v426 = vunpack.c.l.b16 %v135
    %v427 = vunpack.c.l.b16 %v136
    %v428 = vunpack.c.l.b16 %v137
    %v429 = vunpack.c.l.b16 %v138
    %v430 = vunpack.c.l.b16 %v139
    %v431 = vunpack.c.l.b16 %v140
    %v432 = vunpack.c.l.b16 %v141
    %v433 = vunpack.c.l.b16 %v142
    %v434 = vunpack.c.l.b16 %v143
    %v435 = vunpack.c.l.b16 %v144
    %v436 = vunpack.c.l.b16 %v145
    %v437 = vunpack.c.l.b16 %v146
    %v438 = vunpack.c.l.b16 %v147
    %v439 = vunpack.c.l.b16 %v148
    %v440 = vunpack.c.l.b16 %v149
    %v441 = vunpack.c.l.b16 %v150
    %v442 = vunpack.c.l.b16 %v151
    %v443 = vunpack.c.l.b16 %v152
    %v444 = vunpack.c.l.b16 %v153
    %v445 = vunpack.c.l.b16 %v154
    %v446 = vunpack.c.l.b16 %v155
    %v447 = vunpack.c.l.b16 %v156
    %v448 = vunpack.c.l.b16 %v157
    %v449 = vunpack.c.l.b16 %v158
    %v450 = vunpack.c.l.b16 %v159
    %v451 = vunpack.c.l.b16 %v160
    %v452 = vunpack.c.l.b16 %v161
    %v453 = vunpack.c.l.b16 %v162
    %v454 = vunpack.c.l.b16 %v163
    %v455 = vunpack.c.l.b16 %v164
    %v456 = vunpack.c.l.b16 %v165
    %v457 = vunpack.c.l.b16 %v166
    %v458 = vunpack.c.l.b16 %v167
    %v459 = vunpack.c.l.b16 %v168
    %v460 = vunpack.c.l.b16 %v169
    %v461 = vunpack.c.l.b16 %v170
    %v462 = vunpack.c.l.b16 %v171
    %v463 = vunpack.c.l.b16 %v172
    %v464 = vunpack.c.l.b16 %v173
    %v465 = vunpack.c.l.b16 %v174
    %v466 = vunpack.c.l.b16 %v175
    %v467 = vunpack.c.l.b16 %v176
    %v468 = vunpack.c.l.b16 %v177
    %v469 = vunpack.c.l.b16 %v178
    %v470 = vunpack.c.l.b16 %v179
    %v471 = vunpack.c.l.b16 %v180
    %v472 = vunpack.c.l.b16 %v181
    %v473 = vunpack.c.l.b16 %v182
    %v474 = vunpack.c.l.b16 %v183
    %v475 = vunpack.c.l.b16 %v184
    %v476 = vunpack.c.l.b16 %v185
    %v477 = vunpack.c.l.b16 %v186
    %v478 = vunpack.c.l.b16 %v187
    %v479 = vunpack.c.l.b16 %v188
    %v480 = vunpack.c.l.b16 %v189
    %v481 = vunpack.c.l.b16 %v190
    %v482 = vunpack.c.l.b16 %v191
    %v483 = vunpack.c.l.b16 %v192
    %v484 = vunpack.c.l.b16 %v193
    %v485 = vunpack.c.l.b16 %v194
    %v486 = vunpack.c.l.b16 %v195
    %v487 = vunpack.c.l.b16 %v196
    %v488 = vunpack.c.l.b16 %v197
    %v489 = vpack.c.b16 %v362, %v361
    %v490 = vpack.c.b16 %v364, %v363
    %v491 = vpack.c.b16 %v366, %v365
    %v492 = vpack.c.b16 %v368, %v367
    %v493 = vpack.c.b16 %v370, %v369
    %v494 = vpack.c.b16 %v372, %v371
    %v495 = vpack.c.b16 %v374, %v373
    %v496 = vpack.c.b16 %v376, %v375
    %v497 = vpack.c.b16 %v378, %v377
    %v498 = vpack.c.b16 %v380, %v379
    %v499 = vpack.c.b16 %v382, %v381
    %v500 = vpack.c.b16 %v384, %v383
    %v501 = vpack.c.b16 %v386, %v385
    %v502 = vpack.c.b16 %v388, %v387
    %v503 = vpack.c.b16 %v390, %v389
    %v504 = vpack.c.b16 %v392, %v391
    %v505 = vpack.c.b16 %v394, %v393
    %v506 = vpack.c.b16 %v396, %v395
    %v507 = vpack.c.b16 %v398, %v397
    %v508 = vpack.c.b16 %v400, %v399
    %v509 = vpack.c.b16 %v402, %v401
    %v510 = vpack.c.b16 %v404, %v403
    %v511 = vpack.c.b16 %v406, %v405
    %v512 = vpack.c.b16 %v408, %v407
    %v513 = vpack.c.b16 %v410, %v409
    %v514 = vpack.c.b16 %v412, %v411
    %v515 = vpack.c.b16 %v414, %v413
    %v516 = vpack.c.b16 %v416, %v415
    %v517 = vpack.c.b16 %v418, %v417
    %v518 = vpack.c.b16 %v420, %v419
    %v519 = vpack.c.b16 %v422, %v421
    %v520 = vpack.c.b16 %v424, %v423
    %v521 = vpack.c.b16 %v426, %v425
    %v522 = vpack.c.b16 %v428, %v427
    %v523 = vpack.c.b16 %v430, %v429
    %v524 = vpack.c.b16 %v432, %v431
    %v525 = vpack.c.b16 %v434, %v433
    %v526 = vpack.c.b16 %v436, %v435
    %v527 = vpack.c.b16 %v438, %v437
    %v528 = vpack.c.b16 %v440, %v439
    %v529 = vpack.c.b16 %v442, %v441
    %v530 = vpack.c.b16 %v444, %v443
    %v531 = vpack.c.b16 %v446, %v445
    %v532 = vpack.c.b16 %v448, %v447
    %v533 = vpack.c.b16 %v450, %v449
    %v534 = vpack.c.b16 %v452, %v451
    %v535 = vpack.c.b16 %v454, %v453
    %v536 = vpack.c.b16 %v456, %v455
    %v537 = vpack.c.b16 %v458, %v457
    %v538 = vpack.c.b16 %v460, %v459
    %v539 = vpack.c.b16 %v462, %v461
    %v540 = vpack.c.b16 %v464, %v463
    %v541 = vpack.c.b16 %v466, %v465
    %v542 = vpack.c.b16 %v468, %v467
    %v543 = vpack.c.b16 %v470, %v469
    %v544 = vpack.c.b16 %v472, %v471
    %v545 = vpack.c.b16 %v474, %v473
    %v546 = vpack.c.b16 %v476, %v475
    %v547 = vpack.c.b16 %v478, %v477
    %v548 = vpack.c.b16 %v480, %v479
    %v549 = vpack.c.b16 %v482, %v481
    %v550 = vpack.c.b16 %v484, %v483
    %v551 = vpack.c.b16 %v486, %v485
    %v552 = vpack.c.b16 %v488, %v487
    %617 = vmatprep.subr.bf16.mxu0 0
    %618 = vmatpush1.bf16.msra.mxu0 %v489
    %619 = vmatprep.subr.bf16.mxu0 0
    %620 = vmatpush1.bf16.msra.mxu0 %v490
    %621 = vmatprep.subr.bf16.mxu0 0
    %622 = vmatpush1.bf16.msra.mxu0 %v491
    %623 = vmatprep.subr.bf16.mxu0 0
    %624 = vmatpush1.bf16.msra.mxu0 %v492
    %625 = vmatprep.subr.bf16.mxu0 0
    %626 = vmatpush1.bf16.msra.mxu0 %v493
    %627 = vmatprep.subr.bf16.mxu0 0
    %628 = vmatpush1.bf16.msra.mxu0 %v494
    %629 = vmatprep.subr.bf16.mxu0 0
    %630 = vmatpush1.bf16.msra.mxu0 %v495
    %631 = vmatprep.subr.bf16.mxu0 0
    %632 = vmatpush1.bf16.msra.mxu0 %v496
    %633 = vmatprep.subr.bf16.mxu0 0
    %634 = vmatpush1.bf16.msra.mxu0 %v497
    %635 = vmatprep.subr.bf16.mxu0 0
    %636 = vmatpush1.bf16.msra.mxu0 %v498
    %637 = vmatprep.subr.bf16.mxu0 0
    %638 = vmatpush1.bf16.msra.mxu0 %v499
    %639 = vmatprep.subr.bf16.mxu0 0
    %640 = vmatpush1.bf16.msra.mxu0 %v500
    %641 = vmatprep.subr.bf16.mxu0 0
    %642 = vmatpush1.bf16.msra.mxu0 %v501
    %643 = vmatprep.subr.bf16.mxu0 0
    %644 = vmatpush1.bf16.msra.mxu0 %v502
    %645 = vmatprep.subr.bf16.mxu0 0
    %646 = vmatpush1.bf16.msra.mxu0 %v503
    %647 = vmatprep.subr.bf16.mxu0 0
    %648 = vmatpush1.bf16.msra.mxu0 %v504
    %649 = vmatprep.mubr.bf16.mxu0 %v218
    %650 = vmatmul.mubr.bf16.gmra.mrb[0].mxu0 %v217
    %v651 = vpop.f32.mrb[0].mxu0
    %v652 = vadd.f32 %v203, %v651
    %v653 = vpop.f32.mrb[0].mxu0
    %v654 = vpop.f32.mrb[0].mxu0
    %v655 = vpop.f32.mrb[0].mxu0
    %656 = vdwg.mxu0
    %657 = vmatprep.subr.bf16.mxu0 0
    %658 = vmatpush1.bf16.msra.mxu0 %v505
    %659 = vmatprep.subr.bf16.mxu0 0
    %660 = vmatpush1.bf16.msra.mxu0 %v506
    %661 = vmatprep.subr.bf16.mxu0 0
    %662 = vmatpush1.bf16.msra.mxu0 %v507
    %663 = vmatprep.subr.bf16.mxu0 0
    %664 = vmatpush1.bf16.msra.mxu0 %v508
    %665 = vmatprep.subr.bf16.mxu0 0
    %666 = vmatpush1.bf16.msra.mxu0 %v509
    %667 = vmatprep.subr.bf16.mxu0 0
    %668 = vmatpush1.bf16.msra.mxu0 %v510
    %669 = vmatprep.subr.bf16.mxu0 0
    %670 = vmatpush1.bf16.msra.mxu0 %v511
    %671 = vmatprep.subr.bf16.mxu0 0
    %672 = vmatpush1.bf16.msra.mxu0 %v512
    %673 = vmatprep.subr.bf16.mxu0 0
    %674 = vmatpush1.bf16.msra.mxu0 %v513
    %675 = vmatprep.subr.bf16.mxu0 0
    %676 = vmatpush1.bf16.msra.mxu0 %v514
    %677 = vmatprep.subr.bf16.mxu0 0
    %678 = vmatpush1.bf16.msra.mxu0 %v515
    %679 = vmatprep.subr.bf16.mxu0 0
    %680 = vmatpush1.bf16.msra.mxu0 %v516
    %681 = vmatprep.subr.bf16.mxu0 0
    %682 = vmatpush1.bf16.msra.mxu0 %v517
    %683 = vmatprep.subr.bf16.mxu0 0
    %684 = vmatpush1.bf16.msra.mxu0 %v518
    %685 = vmatprep.subr.bf16.mxu0 0
    %686 = vmatpush1.bf16.msra.mxu0 %v519
    %687 = vmatprep.subr.bf16.mxu0 0
    %688 = vmatpush1.bf16.msra.mxu0 %v520
    %689 = vmatprep.mubr.bf16.mxu0 %v220
    %690 = vmatmul.mubr.bf16.gmra.mrb[0].mxu0 %v219
    %v691 = vpop.f32.mrb[0].mxu0
    %v692 = vadd.f32 %v652, %v691
    %v693 = vpop.f32.mrb[0].mxu0
    %v694 = vpop.f32.mrb[0].mxu0
    %v695 = vpop.f32.mrb[0].mxu0
    %696 = vdwg.mxu0
    %697 = vmatprep.subr.bf16.mxu0 0
    %698 = vmatpush1.bf16.msra.mxu0 %v521
    %699 = vmatprep.subr.bf16.mxu0 0
    %700 = vmatpush1.bf16.msra.mxu0 %v522
    %701 = vmatprep.subr.bf16.mxu0 0
    %702 = vmatpush1.bf16.msra.mxu0 %v523
    %703 = vmatprep.subr.bf16.mxu0 0
    %704 = vmatpush1.bf16.msra.mxu0 %v524
    %705 = vmatprep.subr.bf16.mxu0 0
    %706 = vmatpush1.bf16.msra.mxu0 %v525
    %707 = vmatprep.subr.bf16.mxu0 0
    %708 = vmatpush1.bf16.msra.mxu0 %v526
    %709 = vmatprep.subr.bf16.mxu0 0
    %710 = vmatpush1.bf16.msra.mxu0 %v527
    %711 = vmatprep.subr.bf16.mxu0 0
    %712 = vmatpush1.bf16.msra.mxu0 %v528
    %713 = vmatprep.subr.bf16.mxu0 0
    %714 = vmatpush1.bf16.msra.mxu0 %v529
    %715 = vmatprep.subr.bf16.mxu0 0
    %716 = vmatpush1.bf16.msra.mxu0 %v530
    %717 = vmatprep.subr.bf16.mxu0 0
    %718 = vmatpush1.bf16.msra.mxu0 %v531
    %719 = vmatprep.subr.bf16.mxu0 0
    %720 = vmatpush1.bf16.msra.mxu0 %v532
    %721 = vmatprep.subr.bf16.mxu0 0
    %722 = vmatpush1.bf16.msra.mxu0 %v533
    %723 = vmatprep.subr.bf16.mxu0 0
    %724 = vmatpush1.bf16.msra.mxu0 %v534
    %725 = vmatprep.subr.bf16.mxu0 0
    %726 = vmatpush1.bf16.msra.mxu0 %v535
    %727 = vmatprep.subr.bf16.mxu0 0
    %728 = vmatpush1.bf16.msra.mxu0 %v536
    %729 = vmatprep.mubr.bf16.mxu0 %v222
    %730 = vmatmul.mubr.bf16.gmra.mrb[0].mxu0 %v221
    %v731 = vpop.f32.mrb[0].mxu0
    %v732 = vadd.f32 %v692, %v731
    %v733 = vpop.f32.mrb[0].mxu0
    %v734 = vpop.f32.mrb[0].mxu0
    %v735 = vpop.f32.mrb[0].mxu0
    %736 = vdwg.mxu0
    %737 = vmatprep.subr.bf16.mxu0 0
    %738 = vmatpush1.bf16.msra.mxu0 %v537
    %739 = vmatprep.subr.bf16.mxu0 0
    %740 = vmatpush1.bf16.msra.mxu0 %v538
    %741 = vmatprep.subr.bf16.mxu0 0
    %742 = vmatpush1.bf16.msra.mxu0 %v539
    %743 = vmatprep.subr.bf16.mxu0 0
    %744 = vmatpush1.bf16.msra.mxu0 %v540
    %745 = vmatprep.subr.bf16.mxu0 0
    %746 = vmatpush1.bf16.msra.mxu0 %v541
    %747 = vmatprep.subr.bf16.mxu0 0
    %748 = vmatpush1.bf16.msra.mxu0 %v542
    %749 = vmatprep.subr.bf16.mxu0 0
    %750 = vmatpush1.bf16.msra.mxu0 %v543
    %751 = vmatprep.subr.bf16.mxu0 0
    %752 = vmatpush1.bf16.msra.mxu0 %v544
    %753 = vmatprep.subr.bf16.mxu0 0
    %754 = vmatpush1.bf16.msra.mxu0 %v545
    %755 = vmatprep.subr.bf16.mxu0 0
    %756 = vmatpush1.bf16.msra.mxu0 %v546
    %757 = vmatprep.subr.bf16.mxu0 0
    %758 = vmatpush1.bf16.msra.mxu0 %v547
    %759 = vmatprep.subr.bf16.mxu0 0
    %760 = vmatpush1.bf16.msra.mxu0 %v548
    %761 = vmatprep.subr.bf16.mxu0 0
    %762 = vmatpush1.bf16.msra.mxu0 %v549
    %763 = vmatprep.subr.bf16.mxu0 0
    %764 = vmatpush1.bf16.msra.mxu0 %v550
    %765 = vmatprep.subr.bf16.mxu0 0
    %766 = vmatpush1.bf16.msra.mxu0 %v551
    %767 = vmatprep.subr.bf16.mxu0 0
    %768 = vmatpush1.bf16.msra.mxu0 %v552
    %769 = vmatprep.mubr.bf16.mxu0 %v224
    %770 = vmatmul.mubr.bf16.gmra.mrb[0].mxu0 %v223
    %v771 = vpop.f32.mrb[0].mxu0
    %v772 = vadd.f32 %v732, %v771
    %v773 = vpop.f32.mrb[0].mxu0
    %v774 = vpop.f32.mrb[0].mxu0
    %v775 = vpop.f32.mrb[0].mxu0
    %776 = vdwg.mxu0
    %v777 = vmax.f32 %v772, 0.0
    %v778 = vld [vmem:[#allocation2] sm:$0xff]
    %v779 = vpack.c.bf16 %v777, %v777
    %v780 = vld [vmem:[#allocation8] sm:$0xf]
    %v781 = vld [vmem:[#allocation8 + $0x4] sm:$0xf]
    %v782 = vld [vmem:[#allocation8 + $0x8] sm:$0xf]
    %v783 = vld [vmem:[#allocation8 + $0xc] sm:$0xf]
    %v784 = vld [vmem:[#allocation8 + $0x10] sm:$0xf]
    %v785 = vld [vmem:[#allocation8 + $0x14] sm:$0xf]
    %v786 = vld [vmem:[#allocation8 + $0x18] sm:$0xf]
    %v787 = vld [vmem:[#allocation8 + $0x1c] sm:$0xf]
    %v788 = vld [vmem:[#allocation8 + $0x20] sm:$0xf]
    %v789 = vld [vmem:[#allocation8 + $0x24] sm:$0xf]
    %v790 = vld [vmem:[#allocation8 + $0x28] sm:$0xf]
    %v791 = vld [vmem:[#allocation8 + $0x2c] sm:$0xf]
    %v792 = vld [vmem:[#allocation8 + $0x30] sm:$0xf]
    %v793 = vld [vmem:[#allocation8 + $0x34] sm:$0xf]
    %v794 = vld [vmem:[#allocation8 + $0x38] sm:$0xf]
    %v795 = vld [vmem:[#allocation8 + $0x3c] sm:$0xf]
    %v812 = vunpack.c.l.b16 %v780
    %v813 = vunpack.c.l.b16 %v781
    %v814 = vunpack.c.l.b16 %v782
    %v815 = vunpack.c.l.b16 %v783
    %v816 = vunpack.c.l.b16 %v784
    %v817 = vunpack.c.l.b16 %v785
    %v818 = vunpack.c.l.b16 %v786
    %v819 = vunpack.c.l.b16 %v787
    %v820 = vunpack.c.l.b16 %v788
    %v821 = vunpack.c.l.b16 %v789
    %v822 = vunpack.c.l.b16 %v790
    %v823 = vunpack.c.l.b16 %v791
    %v824 = vunpack.c.l.b16 %v792
    %v825 = vunpack.c.l.b16 %v793
    %v826 = vunpack.c.l.b16 %v794
    %v827 = vunpack.c.l.b16 %v795
    %v828 = vpack.c.b16 %v813, %v812
    %v829 = vpack.c.b16 %v815, %v814
    %v830 = vpack.c.b16 %v817, %v816
    %v831 = vpack.c.b16 %v819, %v818
    %v832 = vpack.c.b16 %v821, %v820
    %v833 = vpack.c.b16 %v823, %v822
    %v834 = vpack.c.b16 %v825, %v824
    %v835 = vpack.c.b16 %v827, %v826
    %844 = vmatprep.subr.bf16.mxu0 0
    %845 = vmatpush1.bf16.msra.mxu0 %v828
    %846 = vmatprep.subr.bf16.mxu0 0
    %847 = vmatpush1.bf16.msra.mxu0 %v829
    %848 = vmatprep.subr.bf16.mxu0 0
    %849 = vmatpush1.bf16.msra.mxu0 %v830
    %850 = vmatprep.subr.bf16.mxu0 0
    %851 = vmatpush1.bf16.msra.mxu0 %v831
    %852 = vmatprep.subr.bf16.mxu0 0
    %853 = vmatpush1.bf16.msra.mxu0 %v832
    %854 = vmatprep.subr.bf16.mxu0 0
    %855 = vmatpush1.bf16.msra.mxu0 %v833
    %856 = vmatprep.subr.bf16.mxu0 0
    %857 = vmatpush1.bf16.msra.mxu0 %v834
    %858 = vmatprep.subr.bf16.mxu0 0
    %859 = vmatpush1.bf16.msra.mxu0 %v835
    %860 = vmatprep.subr.bf16.mxu0 0
    %861 = vmatpush1.bf16.msra.mxu0 0
    %862 = vmatprep.subr.bf16.mxu0 0
    %863 = vmatpush1.bf16.msra.mxu0 0
    %864 = vmatprep.subr.bf16.mxu0 0
    %865 = vmatpush1.bf16.msra.mxu0 0
    %866 = vmatprep.subr.bf16.mxu0 0
    %867 = vmatpush1.bf16.msra.mxu0 0
    %868 = vmatprep.subr.bf16.mxu0 0
    %869 = vmatpush1.bf16.msra.mxu0 0
    %870 = vmatprep.subr.bf16.mxu0 0
    %871 = vmatpush1.bf16.msra.mxu0 0
    %872 = vmatprep.subr.bf16.mxu0 0
    %873 = vmatpush1.bf16.msra.mxu0 0
    %874 = vmatprep.subr.bf16.mxu0 0
    %875 = vmatpush1.bf16.msra.mxu0 0
    %876 = vmatprep.mubr.bf16.mxu0 0
    %877 = vmatmul.mubr.bf16.gmra.mrb[0].mxu0 %v779
    %v878 = vpop.f32.mrb[0].mxu0
    %v879 = vadd.f32 0.0, %v878
    %v880 = vpop.f32.mrb[0].mxu0
    %v881 = vpop.f32.mrb[0].mxu0
    %v882 = vpop.f32.mrb[0].mxu0
    %883 = vdwg.mxu0
    %v884 = vadd.f32 %v778, %v879
    %885 = vst [vmem:[#allocation2] sm:$0xff] %v884
    // Predicated region
    $region38: #{tpu_custom_call.1} parent=1 // pred_check
      %p886 = pneg %p61
    $region39: #{tpu_custom_call.1} parent=1 // pred_check_branch
      %888 = sbr.rel (%p886) target = $region41
    $region40: #{tpu_custom_call.1} parent=1 // pred_region
      %v889 = vld [vmem:[#allocation2] sm:$0xff]
      %v890 = vld [vmem:[%s4] sm:$0x1]
      %v892 = vlaneseq
      %v893 = vshrl.u32 %v892, 7
      %v894 = vsub.s32 0, %v893
      %v895 = vrot.slane %v890, %v894
      %v897 = vadd.f32 %v889, %v895
      %898 = vst [vmem:[#allocation9] sm:$0xff] %v897
    $region41: #{tpu_custom_call.1} parent=1 // pred_fallthru
      _
    // Predicated region
    $region42: #{tpu_custom_call.1} parent=1 // pred_check
      _
    $region43: #{tpu_custom_call.1} parent=1 // pred_check_branch
      %900 = sbr.rel (0) target = $region45
    $region44: #{tpu_custom_call.1} parent=1 // pred_region
      %s902 = ssub.s32 128, 128
      %903 = vsyncadd [#allocation5], %s902
      %s905 = sshll.u32 [#allocation9], 4
      %s906 = int_to_ptr.vmem [resolvable:$true] %s905
      %908 = dma.vmem_to_hbm [thread:$0]  %s906, 128, %s5, [#allocation5]
    $region45: #{tpu_custom_call.1} parent=1 // pred_fallthru
      _
    // Predicated region
    $region46: #{tpu_custom_call.1} parent=1 // pred_check
      _
    $region47: #{tpu_custom_call.1} parent=1 // pred_check_branch
      %910 = sbr.rel (0) target = $region49
    $region48: #{tpu_custom_call.1} parent=1 // pred_region
      %911 = dma.done [#allocation5], 128
    $region49: #{tpu_custom_call.1} parent=1 // pred_fallthru
      _
    %912 = vsyncpa [#allocation4], 1
    %913 = vsyncpa [#allocation7], 1
    %914 = vsyncpa [#allocation5], 1

</llo_original>
